<compile_context>
chip_gen: v6e
topology: v6e:2x2x1
jax: 0.10.0
libtpu: 0.0.40
codegen_flags: <defaults>
</compile_context>

<pallas_src>
import jax
import jax.numpy as jnp
from jax.experimental import pallas as pl
from jax.experimental.pallas import tpu as pltpu

HIDDEN = 128
IMG = 28 * 28                      # 784, hardcoded by the module's forward
IN_CHANNELS = 3
OUT_DIM = IMG * IN_CHANNELS        # 2352 = 3*28*28
G = 3 * HIDDEN                     # packed gates [i | g | o] (f gate is dead: c0 == 0)
TM = 1024                          # max rows per grid step (fits all generations)


def _round_up(v, m):
    return ((v + m - 1) // m) * m


def _choose_tile(n):
    """Row-tile size: big tiles for large batches, >=2 grid steps otherwise (v7x)."""
    if n >= 2 * TM:
        return TM
    # Aim for ~2 grid steps so both v7x TensorCores get work; 16-row bf16 sublane tile.
    return max(_round_up(-(-n // 2), 16), 16)


def pixelrnn_kernel(x_ref, wih0_ref, b0_ref, wih1_ref, b1_ref,
                    wfc_ref, bfc_ref, out_ref):
    """One batch tile: two zero-state LSTM cells + fc.  bf16 MXU ops, f32 accumulate."""
    H = HIDDEN

    def cell(xv, w_ref, b_ref):
        # gates packed [i | g | o]; forget gate omitted (it multiplies c0 == 0),
        # recurrent h0 @ W_hh^T term omitted (identically zero); b_hh folded into b.
        gates = jnp.dot(xv, w_ref[...], preferred_element_type=jnp.float32)
        gates = gates + b_ref[...]
        i = jax.nn.sigmoid(gates[:, 0 * H:1 * H])
        g = jnp.tanh(gates[:, 1 * H:2 * H])
        o = jax.nn.sigmoid(gates[:, 2 * H:3 * H])
        return o * jnp.tanh(i * g)                        # h = o * tanh(c), c = i*g

    x = x_ref[...]                                        # (tm, 784) bf16
    h0 = cell(x, wih0_ref, b0_ref)                        # (tm, 128) f32
    h1 = cell(h0.astype(jnp.bfloat16), wih1_ref, b1_ref)  # (tm, 128) f32
    out_ref[...] = (jnp.dot(h1.astype(jnp.bfloat16), wfc_ref[...],
                            preferred_element_type=jnp.float32)
                    + bfc_ref[...])                       # (tm, 2352) f32, lane-dense


def init_params(key):
    """PyTorch-style U(-1/sqrt(H), 1/sqrt(H)) init.

    Returns (raw, packed):
      raw    — full PyTorch-shaped f32 parameters (incl. W_hh / forget gate) used
               by the exact reference.
      packed — kernel-layout parameters (transposed, dead gate dropped, biases
               merged, bf16 matmul operands).
    """
    ks = jax.random.split(key, 10)
    s = 1.0 / float(jnp.sqrt(HIDDEN))
    u = lambda k, shape: jax.random.uniform(k, shape, jnp.float32, -s, s)

    raw = {
        "w_ih0": u(ks[0], (4 * HIDDEN, IMG)),
        "w_hh0": u(ks[1], (4 * HIDDEN, HIDDEN)),
        "b_ih0": u(ks[2], (4 * HIDDEN,)),
        "b_hh0": u(ks[3], (4 * HIDDEN,)),
        "w_ih1": u(ks[4], (4 * HIDDEN, HIDDEN)),
        "w_hh1": u(ks[5], (4 * HIDDEN, HIDDEN)),
        "b_ih1": u(ks[6], (4 * HIDDEN,)),
        "b_hh1": u(ks[7], (4 * HIDDEN,)),
        "w_fc": u(ks[8], (OUT_DIM, HIDDEN)),
        "b_fc": u(ks[9], (OUT_DIM,)),
    }

    H = HIDDEN
    keep = jnp.concatenate([jnp.arange(0, H),             # i
                            jnp.arange(2 * H, 3 * H),     # g
                            jnp.arange(3 * H, 4 * H)])    # o  (drop dead f gate)

    def pack(w_ih, b_ih, b_hh):
        w = jnp.transpose(w_ih[keep])                     # (in_dim, 3H)
        b = (b_ih + b_hh)[keep].reshape(1, G)             # bias stays f32
        return w.astype(jnp.bfloat16), b

    w0, b0 = pack(raw["w_ih0"], raw["b_ih0"], raw["b_hh0"])   # (784, 384) bf16
    w1, b1 = pack(raw["w_ih1"], raw["b_ih1"], raw["b_hh1"])   # (128, 384) bf16
    w_fc_t = jnp.transpose(raw["w_fc"]).astype(jnp.bfloat16)  # (128, 2352) bf16
    b_fc = raw["b_fc"].reshape(1, OUT_DIM)                    # (1, 2352) f32

    packed = {"w0": w0, "b0": b0, "w1": w1, "b1": b1,
              "w_fc": w_fc_t, "b_fc": b_fc}
    return raw, packed


@jax.jit
def pixelrnn_forward(x, params):
    # Matches torch: x.view(-1, 28*28)  ->  effective batch N = B*C rows.
    x2 = x.reshape(-1, IMG).astype(jnp.bfloat16)
    n = x2.shape[0]
    tm = _choose_tile(n)
    n_pad = _round_up(n, tm)

    x2p = jnp.pad(x2, ((0, n_pad - n), (0, 0)))           # rows only, no lane padding

    out = pl.pallas_call(
        pixelrnn_kernel,
        out_shape=jax.ShapeDtypeStruct((n_pad, OUT_DIM), jnp.float32),
        grid_spec=pltpu.PrefetchScalarGridSpec(
            num_scalar_prefetch=0,
            grid=(n_pad // tm,),
            in_specs=[
                pl.BlockSpec((tm, IMG), lambda i: (i, 0)),          # x tile (784 = full dim)
                pl.BlockSpec((IMG, G), lambda i: (0, 0)),           # w0 (VMEM-resident)
                pl.BlockSpec((1, G), lambda i: (0, 0)),             # b0
                pl.BlockSpec((HIDDEN, G), lambda i: (0, 0)),        # w1
                pl.BlockSpec((1, G), lambda i: (0, 0)),             # b1
                pl.BlockSpec((HIDDEN, OUT_DIM), lambda i: (0, 0)),  # w_fc (2352 = full dim)
                pl.BlockSpec((1, OUT_DIM), lambda i: (0, 0)),       # b_fc
            ],
            out_specs=pl.BlockSpec((tm, OUT_DIM), lambda i: (i, 0)),
        ),
        compiler_params=pltpu.CompilerParams(
            dimension_semantics=("parallel",),      # shard row-tiles on v7x's 2 TCs
            vmem_limit_bytes=48 * 1024 * 1024,      # TM=1024 footprint ~24 MiB; < 64 MiB (v7x)
        ),
    )(x2p, params["w0"], params["b0"], params["w1"], params["b1"],
      params["w_fc"], params["b_fc"])

    if n_pad != n:                                         # cheap row-only trim
        out = out[:n]
    return out.reshape(-1, IN_CHANNELS, 28, 28)            # torch: out.view(-1, 3, 28, 28)


def pixelrnn_reference(x, raw):
    """Exact f32 reference of the PyTorch module: full 4-gate LSTM (incl. W_hh,
    forget gate, zero initial state), 2 layers, seq_len=1, then fc."""
    H = HIDDEN
    x2 = x.reshape(-1, IMG).astype(jnp.float32)

    def lstm_cell(v, w_ih, w_hh, b_ih, b_hh):
        h_prev = jnp.zeros((v.shape[0], H), jnp.float32)
        c_prev = jnp.zeros((v.shape[0], H), jnp.float32)
        gates = v @ w_ih.T + b_ih + h_prev @ w_hh.T + b_hh
        i = jax.nn.sigmoid(gates[:, 0 * H:1 * H])
        f = jax.nn.sigmoid(gates[:, 1 * H:2 * H])
        g = jnp.tanh(gates[:, 2 * H:3 * H])
        o = jax.nn.sigmoid(gates[:, 3 * H:4 * H])
        c = f * c_prev + i * g
        return o * jnp.tanh(c)

    h0 = lstm_cell(x2, raw["w_ih0"], raw["w_hh0"], raw["b_ih0"], raw["b_hh0"])
    h1 = lstm_cell(h0, raw["w_ih1"], raw["w_hh1"], raw["b_ih1"], raw["b_hh1"])
    out = h1 @ raw["w_fc"].T + raw["b_fc"]
    return out.reshape(-1, IN_CHANNELS, 28, 28)


if __name__ == "__main__":
    key = jax.random.PRNGKey(0)
    k_param, k_x = jax.random.split(key)

    raw_params, packed_params = init_params(k_param)
    # Small batch; spatial 28x28 is fixed by the module's forward.
    x = jax.random.normal(k_x, (2, IN_CHANNELS, 28, 28), dtype=jnp.float32)

    y = pixelrnn_forward(x, packed_params)
    y = jax.block_until_ready(y)

    y_ref = pixelrnn_reference(x, raw_params)
    assert y.shape == (x.shape[0] * IN_CHANNELS, IN_CHANNELS, 28, 28), y.shape
    # Kernel uses bf16 inputs/weights (f32 accumulate); reference is pure f32 from
    # the raw PyTorch-shaped parameters, so this tolerance covers real bf16
    # quantization error of three chained matmuls.
    assert jnp.allclose(y, y_ref, atol=5e-2, rtol=5e-2), "mismatch vs f32 reference"

    print("KERNEL_OK")
</pallas_src>

<mosaic_0001>
module attributes {stable_mosaic.version = 11 : i64} {
  func.func @pixelrnn_kernel(%arg0: i32, %arg1: memref<16x784xbf16, #tpu.memory_space<vmem>>, %arg2: memref<784x384xbf16, #tpu.memory_space<vmem>>, %arg3: memref<1x384xf32, #tpu.memory_space<vmem>>, %arg4: memref<128x384xbf16, #tpu.memory_space<vmem>>, %arg5: memref<1x384xf32, #tpu.memory_space<vmem>>, %arg6: memref<128x2352xbf16, #tpu.memory_space<vmem>>, %arg7: memref<1x2352xf32, #tpu.memory_space<vmem>>, %arg8: memref<16x2352xf32, #tpu.memory_space<vmem>>) attributes {dimension_semantics = [#tpu.dimension_semantics<parallel>], iteration_bounds = array<i64: 1>, scalar_prefetch = 0 : i64, scratch_operands = 0 : i64, tpu.core_type = #tpu.core_type<tc>, window_params = [{transform_indices = @transform_0, window_bounds = array<i64: 16, 784>}, {pipeline_mode = #tpu.pipeline_mode<synchronous>, transform_indices = @transform_1, window_bounds = array<i64: 784, 384>}, {pipeline_mode = #tpu.pipeline_mode<synchronous>, transform_indices = @transform_2, window_bounds = array<i64: 1, 384>}, {pipeline_mode = #tpu.pipeline_mode<synchronous>, transform_indices = @transform_3, window_bounds = array<i64: 128, 384>}, {pipeline_mode = #tpu.pipeline_mode<synchronous>, transform_indices = @transform_4, window_bounds = array<i64: 1, 384>}, {pipeline_mode = #tpu.pipeline_mode<synchronous>, transform_indices = @transform_5, window_bounds = array<i64: 128, 2352>}, {pipeline_mode = #tpu.pipeline_mode<synchronous>, transform_indices = @transform_6, window_bounds = array<i64: 1, 2352>}, {transform_indices = @transform_7, window_bounds = array<i64: 16, 2352>}]} {
    %c0 = arith.constant 0 : index
    %c0_0 = arith.constant 0 : index
    %0 = vector.load %arg1[%c0, %c0_0] : memref<16x784xbf16, #tpu.memory_space<vmem>>, vector<16x784xbf16>
    %c0_1 = arith.constant 0 : index
    %c0_2 = arith.constant 0 : index
    %1 = vector.load %arg2[%c0_1, %c0_2] : memref<784x384xbf16, #tpu.memory_space<vmem>>, vector<784x384xbf16>
    %cst = arith.constant dense<0.000000e+00> : vector<16x384xf32>
    %2 = tpu.matmul %0, %1, %cst {dimension_numbers = #tpu.dot_dimension_numbers<[1], [0], [0], [1], [0, 0, 1, 1], [], []>} : vector<16x784xbf16>, vector<784x384xbf16>, vector<16x384xf32> -> vector<16x384xf32>
    %c0_3 = arith.constant 0 : index
    %c0_4 = arith.constant 0 : index
    %3 = vector.load %arg3[%c0_3, %c0_4] : memref<1x384xf32, #tpu.memory_space<vmem>>, vector<1x384xf32>
    %4 = vector.broadcast %3 : vector<1x384xf32> to vector<16x384xf32>
    %5 = arith.addf %2, %4 : vector<16x384xf32>
    %6 = vector.extract_strided_slice %5 {offsets = [0, 0], sizes = [16, 128], strides = [1, 1]} : vector<16x384xf32> to vector<16x128xf32>
    %7 = arith.negf %6 : vector<16x128xf32>
    %8 = math.exp %7 : vector<16x128xf32>
    %cst_5 = arith.constant 1.000000e+00 : f32
    %9 = vector.broadcast %cst_5 : f32 to vector<16x128xf32>
    %10 = arith.addf %9, %8 : vector<16x128xf32>
    %11 = arith.divf %9, %10 : vector<16x128xf32>
    %12 = vector.extract_strided_slice %5 {offsets = [0, 128], sizes = [16, 128], strides = [1, 1]} : vector<16x384xf32> to vector<16x128xf32>
    %13 = math.tanh %12 : vector<16x128xf32>
    %14 = vector.extract_strided_slice %5 {offsets = [0, 256], sizes = [16, 128], strides = [1, 1]} : vector<16x384xf32> to vector<16x128xf32>
    %15 = arith.negf %14 : vector<16x128xf32>
    %16 = math.exp %15 : vector<16x128xf32>
    %cst_6 = arith.constant 1.000000e+00 : f32
    %17 = vector.broadcast %cst_6 : f32 to vector<16x128xf32>
    %18 = arith.addf %17, %16 : vector<16x128xf32>
    %19 = arith.divf %17, %18 : vector<16x128xf32>
    %20 = arith.mulf %11, %13 : vector<16x128xf32>
    %21 = math.tanh %20 : vector<16x128xf32>
    %22 = arith.mulf %19, %21 : vector<16x128xf32>
    %23 = arith.truncf %22 : vector<16x128xf32> to vector<16x128xbf16>
    %c0_7 = arith.constant 0 : index
    %c0_8 = arith.constant 0 : index
    %24 = vector.load %arg4[%c0_7, %c0_8] : memref<128x384xbf16, #tpu.memory_space<vmem>>, vector<128x384xbf16>
    %cst_9 = arith.constant dense<0.000000e+00> : vector<16x384xf32>
    %25 = tpu.matmul %23, %24, %cst_9 {dimension_numbers = #tpu.dot_dimension_numbers<[1], [0], [0], [1], [0, 0, 1, 1], [], []>} : vector<16x128xbf16>, vector<128x384xbf16>, vector<16x384xf32> -> vector<16x384xf32>
    %c0_10 = arith.constant 0 : index
    %c0_11 = arith.constant 0 : index
    %26 = vector.load %arg5[%c0_10, %c0_11] : memref<1x384xf32, #tpu.memory_space<vmem>>, vector<1x384xf32>
    %27 = vector.broadcast %26 : vector<1x384xf32> to vector<16x384xf32>
    %28 = arith.addf %25, %27 : vector<16x384xf32>
    %29 = vector.extract_strided_slice %28 {offsets = [0, 0], sizes = [16, 128], strides = [1, 1]} : vector<16x384xf32> to vector<16x128xf32>
    %30 = arith.negf %29 : vector<16x128xf32>
    %31 = math.exp %30 : vector<16x128xf32>
    %cst_12 = arith.constant 1.000000e+00 : f32
    %32 = vector.broadcast %cst_12 : f32 to vector<16x128xf32>
    %33 = arith.addf %32, %31 : vector<16x128xf32>
    %34 = arith.divf %32, %33 : vector<16x128xf32>
    %35 = vector.extract_strided_slice %28 {offsets = [0, 128], sizes = [16, 128], strides = [1, 1]} : vector<16x384xf32> to vector<16x128xf32>
    %36 = math.tanh %35 : vector<16x128xf32>
    %37 = vector.extract_strided_slice %28 {offsets = [0, 256], sizes = [16, 128], strides = [1, 1]} : vector<16x384xf32> to vector<16x128xf32>
    %38 = arith.negf %37 : vector<16x128xf32>
    %39 = math.exp %38 : vector<16x128xf32>
    %cst_13 = arith.constant 1.000000e+00 : f32
    %40 = vector.broadcast %cst_13 : f32 to vector<16x128xf32>
    %41 = arith.addf %40, %39 : vector<16x128xf32>
    %42 = arith.divf %40, %41 : vector<16x128xf32>
    %43 = arith.mulf %34, %36 : vector<16x128xf32>
    %44 = math.tanh %43 : vector<16x128xf32>
    %45 = arith.mulf %42, %44 : vector<16x128xf32>
    %46 = arith.truncf %45 : vector<16x128xf32> to vector<16x128xbf16>
    %c0_14 = arith.constant 0 : index
    %c0_15 = arith.constant 0 : index
    %47 = vector.load %arg6[%c0_14, %c0_15] : memref<128x2352xbf16, #tpu.memory_space<vmem>>, vector<128x2352xbf16>
    %cst_16 = arith.constant dense<0.000000e+00> : vector<16x2352xf32>
    %48 = tpu.matmul %46, %47, %cst_16 {dimension_numbers = #tpu.dot_dimension_numbers<[1], [0], [0], [1], [0, 0, 1, 1], [], []>} : vector<16x128xbf16>, vector<128x2352xbf16>, vector<16x2352xf32> -> vector<16x2352xf32>
    %c0_17 = arith.constant 0 : index
    %c0_18 = arith.constant 0 : index
    %49 = vector.load %arg7[%c0_17, %c0_18] : memref<1x2352xf32, #tpu.memory_space<vmem>>, vector<1x2352xf32>
    %50 = vector.broadcast %49 : vector<1x2352xf32> to vector<16x2352xf32>
    %51 = arith.addf %48, %50 : vector<16x2352xf32>
    %c0_19 = arith.constant 0 : index
    %c0_20 = arith.constant 0 : index
    %52 = vector.load %arg8[%c0_19, %c0_20] : memref<16x2352xf32, #tpu.memory_space<vmem>>, vector<16x2352xf32>
    tpu.vector_store %arg8[%c0_19, %c0_20], %51 {strides = array<i32>} : memref<16x2352xf32, #tpu.memory_space<vmem>>, vector<16x2352xf32>,
    return
  }
  func.func @transform_0(%arg0: i32) -> (i32, i32) {
    %c0_i32 = arith.constant 0 : i32
    %c0_i32_0 = arith.constant 0 : i32
    return %arg0, %c0_i32 : i32, i32
  }
  func.func @transform_1(%arg0: i32) -> (i32, i32) {
    %c0_i32 = arith.constant 0 : i32
    %c0_i32_0 = arith.constant 0 : i32
    %c0_i32_1 = arith.constant 0 : i32
    return %c0_i32, %c0_i32_0 : i32, i32
  }
  func.func @transform_2(%arg0: i32) -> (i32, i32) {
    %c0_i32 = arith.constant 0 : i32
    %c0_i32_0 = arith.constant 0 : i32
    %c0_i32_1 = arith.constant 0 : i32
    return %c0_i32, %c0_i32_0 : i32, i32
  }
  func.func @transform_3(%arg0: i32) -> (i32, i32) {
    %c0_i32 = arith.constant 0 : i32
    %c0_i32_0 = arith.constant 0 : i32
    %c0_i32_1 = arith.constant 0 : i32
    return %c0_i32, %c0_i32_0 : i32, i32
  }
  func.func @transform_4(%arg0: i32) -> (i32, i32) {
    %c0_i32 = arith.constant 0 : i32
    %c0_i32_0 = arith.constant 0 : i32
    %c0_i32_1 = arith.constant 0 : i32
    return %c0_i32, %c0_i32_0 : i32, i32
  }
  func.func @transform_5(%arg0: i32) -> (i32, i32) {
    %c0_i32 = arith.constant 0 : i32
    %c0_i32_0 = arith.constant 0 : i32
    %c0_i32_1 = arith.constant 0 : i32
    return %c0_i32, %c0_i32_0 : i32, i32
  }
  func.func @transform_6(%arg0: i32) -> (i32, i32) {
    %c0_i32 = arith.constant 0 : i32
    %c0_i32_0 = arith.constant 0 : i32
    %c0_i32_1 = arith.constant 0 : i32
    return %c0_i32, %c0_i32_0 : i32, i32
  }
  func.func @transform_7(%arg0: i32) -> (i32, i32) {
    %c0_i32 = arith.constant 0 : i32
    %c0_i32_0 = arith.constant 0 : i32
    return %arg0, %c0_i32 : i32, i32
  }
}

</mosaic_0001>

<llo_original>
// kernel: pixelrnn_forward.1
$region0: #{pixelrnn_forward.1}
  #allocation0 [shape = 'u32[]', space=smem, size = 0x4, offset = 0x4, fixed_abs, tag = 'smem constant byte address 0x4 - core index']
  #allocation1 [shape = 'u32[144,128]{1,0:T(1,128)}', space=vmem, size = 0x12000, scoped, tag = 'internal scratch']
  %s0 = inlined_call_operand.vmem [shape: bf16[16,784], index: 0, kind: input, shape index: {}]
  %s1 = inlined_call_operand.vmem [shape: bf16[784,384], index: 1, kind: input, shape index: {}]
  %s2 = inlined_call_operand.vmem [shape: f32[1,384], index: 2, kind: input, shape index: {}]
  %s3 = inlined_call_operand.vmem [shape: bf16[128,384], index: 3, kind: input, shape index: {}]
  %s4 = inlined_call_operand.vmem [shape: f32[1,384], index: 4, kind: input, shape index: {}]
  %s5 = inlined_call_operand.vmem [shape: bf16[128,2352], index: 5, kind: input, shape index: {}]
  %s6 = inlined_call_operand.vmem [shape: f32[1,2352], index: 6, kind: input, shape index: {}]
  %s7 = inlined_call_operand.vmem [shape: f32[16,2352], index: 7, kind: output, shape index: {}]
  %s8 = sld [smem:[#allocation0]]
  $region38: #{pixelrnn_forward.1} parent=0
    _
  %s10 = ssub.s32 1, %s8
  %s11 = scalar_select 0, %s10, %s8
  // Predicated region
  $region2: #{pixelrnn_forward.1} parent=0 // pred_check
    _
  $region3: #{pixelrnn_forward.1} parent=0 // pred_check_branch
    %13 = sbr.rel (0) target = $region5
  $region4: #{pixelrnn_forward.1} parent=0 // pred_region
    _
  $region5: #{pixelrnn_forward.1} parent=0 // pred_fallthru
    _
  // Predicated region
  $region6: #{pixelrnn_forward.1} parent=0 // pred_check
    _
  $region7: #{pixelrnn_forward.1} parent=0 // pred_check_branch
    %15 = sbr.rel (0) target = $region9
  $region8: #{pixelrnn_forward.1} parent=0 // pred_region
    _
  $region9: #{pixelrnn_forward.1} parent=0 // pred_fallthru
    _
  // Predicated region
  $region10: #{pixelrnn_forward.1} parent=0 // pred_check
    _
  $region11: #{pixelrnn_forward.1} parent=0 // pred_check_branch
    %17 = sbr.rel (0) target = $region13
  $region12: #{pixelrnn_forward.1} parent=0 // pred_region
    _
  $region13: #{pixelrnn_forward.1} parent=0 // pred_fallthru
    _
  // Predicated region
  $region14: #{pixelrnn_forward.1} parent=0 // pred_check
    _
  $region15: #{pixelrnn_forward.1} parent=0 // pred_check_branch
    %19 = sbr.rel (0) target = $region17
  $region16: #{pixelrnn_forward.1} parent=0 // pred_region
    _
  $region17: #{pixelrnn_forward.1} parent=0 // pred_fallthru
    _
  // Predicated region
  $region18: #{pixelrnn_forward.1} parent=0 // pred_check
    _
  $region19: #{pixelrnn_forward.1} parent=0 // pred_check_branch
    %21 = sbr.rel (0) target = $region21
  $region20: #{pixelrnn_forward.1} parent=0 // pred_region
    _
  $region21: #{pixelrnn_forward.1} parent=0 // pred_fallthru
    _
  // Predicated region
  $region22: #{pixelrnn_forward.1} parent=0 // pred_check
    _
  $region23: #{pixelrnn_forward.1} parent=0 // pred_check_branch
    %23 = sbr.rel (0) target = $region25
  $region24: #{pixelrnn_forward.1} parent=0 // pred_region
    _
  $region25: #{pixelrnn_forward.1} parent=0 // pred_fallthru
    _
  // Predicated region
  $region26: #{pixelrnn_forward.1} parent=0 // pred_check
    _
  $region27: #{pixelrnn_forward.1} parent=0 // pred_check_branch
    %25 = sbr.rel (0) target = $region29
  $region28: #{pixelrnn_forward.1} parent=0 // pred_region
    _
  $region29: #{pixelrnn_forward.1} parent=0 // pred_fallthru
    _
  %v27 = vld [vmem:[%s0] sm:$0xff]
  %v28 = vld [vmem:[%s0 + $0x8] sm:$0xff]
  %v29 = vld [vmem:[%s0 + $0x10] sm:$0xff]
  %v30 = vld [vmem:[%s0 + $0x18] sm:$0xf]
  %v31 = vld [vmem:[%s0 + $0x1c] sm:$0xff]
  %v32 = vld [vmem:[%s0 + $0x24] sm:$0xff]
  %v33 = vld [vmem:[%s0 + $0x2c] sm:$0xff]
  %v34 = vld [vmem:[%s0 + $0x34] sm:$0xf]
  %v35 = vld [vmem:[%s1] sm:$0xff]
  %v36 = vld [vmem:[%s1 + $0x8] sm:$0xf]
  %v37 = vld [vmem:[%s1 + $0xc] sm:$0xff]
  %v38 = vld [vmem:[%s1 + $0x14] sm:$0xf]
  %v39 = vld [vmem:[%s1 + $0x18] sm:$0xff]
  %v40 = vld [vmem:[%s1 + $0x20] sm:$0xf]
  %v41 = vld [vmem:[%s1 + $0x24] sm:$0xff]
  %v42 = vld [vmem:[%s1 + $0x2c] sm:$0xf]
  %v43 = vld [vmem:[%s1 + $0x30] sm:$0xff]
  %v44 = vld [vmem:[%s1 + $0x38] sm:$0xf]
  %v45 = vld [vmem:[%s1 + $0x3c] sm:$0xff]
  %v46 = vld [vmem:[%s1 + $0x44] sm:$0xf]
  %v47 = vld [vmem:[%s1 + $0x48] sm:$0xff]
  %v48 = vld [vmem:[%s1 + $0x50] sm:$0xf]
  %v49 = vld [vmem:[%s1 + $0x54] sm:$0xff]
  %v50 = vld [vmem:[%s1 + $0x5c] sm:$0xf]
  %v51 = vld [vmem:[%s1 + $0x60] sm:$0xff]
  %v52 = vld [vmem:[%s1 + $0x68] sm:$0xf]
  %v53 = vld [vmem:[%s1 + $0x6c] sm:$0xff]
  %v54 = vld [vmem:[%s1 + $0x74] sm:$0xf]
  %v55 = vld [vmem:[%s1 + $0x78] sm:$0xff]
  %v56 = vld [vmem:[%s1 + $0x80] sm:$0xf]
  %v57 = vld [vmem:[%s1 + $0x84] sm:$0xff]
  %v58 = vld [vmem:[%s1 + $0x8c] sm:$0xf]
  %v59 = vld [vmem:[%s1 + $0x90] sm:$0xff]
  %v60 = vld [vmem:[%s1 + $0x98] sm:$0xf]
  %v61 = vld [vmem:[%s1 + $0x9c] sm:$0xff]
  %v62 = vld [vmem:[%s1 + $0xa4] sm:$0xf]
  %v63 = vld [vmem:[%s1 + $0xa8] sm:$0xff]
  %v64 = vld [vmem:[%s1 + $0xb0] sm:$0xf]
  %v65 = vld [vmem:[%s1 + $0xb4] sm:$0xff]
  %v66 = vld [vmem:[%s1 + $0xbc] sm:$0xf]
  %v67 = vld [vmem:[%s1 + $0xc0] sm:$0xff]
  %v68 = vld [vmem:[%s1 + $0xc8] sm:$0xf]
  %v69 = vld [vmem:[%s1 + $0xcc] sm:$0xff]
  %v70 = vld [vmem:[%s1 + $0xd4] sm:$0xf]
  %v71 = vld [vmem:[%s1 + $0xd8] sm:$0xff]
  %v72 = vld [vmem:[%s1 + $0xe0] sm:$0xf]
  %v73 = vld [vmem:[%s1 + $0xe4] sm:$0xff]
  %v74 = vld [vmem:[%s1 + $0xec] sm:$0xf]
  %v75 = vld [vmem:[%s1 + $0xf0] sm:$0xff]
  %v76 = vld [vmem:[%s1 + $0xf8] sm:$0xf]
  %v77 = vld [vmem:[%s1 + $0xfc] sm:$0xff]
  %v78 = vld [vmem:[%s1 + $0x104] sm:$0xf]
  %v79 = vld [vmem:[%s1 + $0x108] sm:$0xff]
  %v80 = vld [vmem:[%s1 + $0x110] sm:$0xf]
  %v81 = vld [vmem:[%s1 + $0x114] sm:$0xff]
  %v82 = vld [vmem:[%s1 + $0x11c] sm:$0xf]
  %v83 = vld [vmem:[%s1 + $0x120] sm:$0xff]
  %v84 = vld [vmem:[%s1 + $0x128] sm:$0xf]
  %v85 = vld [vmem:[%s1 + $0x12c] sm:$0xff]
  %v86 = vld [vmem:[%s1 + $0x134] sm:$0xf]
  %v87 = vld [vmem:[%s1 + $0x138] sm:$0xff]
  %v88 = vld [vmem:[%s1 + $0x140] sm:$0xf]
  %v89 = vld [vmem:[%s1 + $0x144] sm:$0xff]
  %v90 = vld [vmem:[%s1 + $0x14c] sm:$0xf]
  %v91 = vld [vmem:[%s1 + $0x150] sm:$0xff]
  %v92 = vld [vmem:[%s1 + $0x158] sm:$0xf]
  %v93 = vld [vmem:[%s1 + $0x15c] sm:$0xff]
  %v94 = vld [vmem:[%s1 + $0x164] sm:$0xf]
  %v95 = vld [vmem:[%s1 + $0x168] sm:$0xff]
  %v96 = vld [vmem:[%s1 + $0x170] sm:$0xf]
  %v97 = vld [vmem:[%s1 + $0x174] sm:$0xff]
  %v98 = vld [vmem:[%s1 + $0x17c] sm:$0xf]
  %v99 = vld [vmem:[%s1 + $0x180] sm:$0xff]
  %v100 = vld [vmem:[%s1 + $0x188] sm:$0xf]
  %v101 = vld [vmem:[%s1 + $0x18c] sm:$0xff]
  %v102 = vld [vmem:[%s1 + $0x194] sm:$0xf]
  %v103 = vld [vmem:[%s1 + $0x198] sm:$0xff]
  %v104 = vld [vmem:[%s1 + $0x1a0] sm:$0xf]
  %v105 = vld [vmem:[%s1 + $0x1a4] sm:$0xff]
  %v106 = vld [vmem:[%s1 + $0x1ac] sm:$0xf]
  %v107 = vld [vmem:[%s1 + $0x1b0] sm:$0xff]
  %v108 = vld [vmem:[%s1 + $0x1b8] sm:$0xf]
  %v109 = vld [vmem:[%s1 + $0x1bc] sm:$0xff]
  %v110 = vld [vmem:[%s1 + $0x1c4] sm:$0xf]
  %v111 = vld [vmem:[%s1 + $0x1c8] sm:$0xff]
  %v112 = vld [vmem:[%s1 + $0x1d0] sm:$0xf]
  %v113 = vld [vmem:[%s1 + $0x1d4] sm:$0xff]
  %v114 = vld [vmem:[%s1 + $0x1dc] sm:$0xf]
  %v115 = vld [vmem:[%s1 + $0x1e0] sm:$0xff]
  %v116 = vld [vmem:[%s1 + $0x1e8] sm:$0xf]
  %v117 = vld [vmem:[%s1 + $0x1ec] sm:$0xff]
  %v118 = vld [vmem:[%s1 + $0x1f4] sm:$0xf]
  %v119 = vld [vmem:[%s1 + $0x1f8] sm:$0xff]
  %v120 = vld [vmem:[%s1 + $0x200] sm:$0xf]
  %v121 = vld [vmem:[%s1 + $0x204] sm:$0xff]
  %v122 = vld [vmem:[%s1 + $0x20c] sm:$0xf]
  %v123 = vld [vmem:[%s1 + $0x210] sm:$0xff]
  %v124 = vld [vmem:[%s1 + $0x218] sm:$0xf]
  %v125 = vld [vmem:[%s1 + $0x21c] sm:$0xff]
  %v126 = vld [vmem:[%s1 + $0x224] sm:$0xf]
  %v127 = vld [vmem:[%s1 + $0x228] sm:$0xff]
  %v128 = vld [vmem:[%s1 + $0x230] sm:$0xf]
  %v129 = vld [vmem:[%s1 + $0x234] sm:$0xff]
  %v130 = vld [vmem:[%s1 + $0x23c] sm:$0xf]
  %v131 = vld [vmem:[%s1 + $0x240] sm:$0xff]
  %v132 = vld [vmem:[%s1 + $0x248] sm:$0xf]
  %v133 = vld [vmem:[%s1 + $0x24c] sm:$0xff]
  %v134 = vld [vmem:[%s1 + $0x254] sm:$0xf]
  %v135 = vld [vmem:[%s1 + $0x258] sm:$0xff]
  %v136 = vld [vmem:[%s1 + $0x260] sm:$0xf]
  %v137 = vld [vmem:[%s1 + $0x264] sm:$0xff]
  %v138 = vld [vmem:[%s1 + $0x26c] sm:$0xf]
  %v139 = vld [vmem:[%s1 + $0x270] sm:$0xff]
  %v140 = vld [vmem:[%s1 + $0x278] sm:$0xf]
  %v141 = vld [vmem:[%s1 + $0x27c] sm:$0xff]
  %v142 = vld [vmem:[%s1 + $0x284] sm:$0xf]
  %v143 = vld [vmem:[%s1 + $0x288] sm:$0xff]
  %v144 = vld [vmem:[%s1 + $0x290] sm:$0xf]
  %v145 = vld [vmem:[%s1 + $0x294] sm:$0xff]
  %v146 = vld [vmem:[%s1 + $0x29c] sm:$0xf]
  %v147 = vld [vmem:[%s1 + $0x2a0] sm:$0xff]
  %v148 = vld [vmem:[%s1 + $0x2a8] sm:$0xf]
  %v149 = vld [vmem:[%s1 + $0x2ac] sm:$0xff]
  %v150 = vld [vmem:[%s1 + $0x2b4] sm:$0xf]
  %v151 = vld [vmem:[%s1 + $0x2b8] sm:$0xff]
  %v152 = vld [vmem:[%s1 + $0x2c0] sm:$0xf]
  %v153 = vld [vmem:[%s1 + $0x2c4] sm:$0xff]
  %v154 = vld [vmem:[%s1 + $0x2cc] sm:$0xf]
  %v155 = vld [vmem:[%s1 + $0x2d0] sm:$0xff]
  %v156 = vld [vmem:[%s1 + $0x2d8] sm:$0xf]
  %v157 = vld [vmem:[%s1 + $0x2dc] sm:$0xff]
  %v158 = vld [vmem:[%s1 + $0x2e4] sm:$0xf]
  %v159 = vld [vmem:[%s1 + $0x2e8] sm:$0xff]
  %v160 = vld [vmem:[%s1 + $0x2f0] sm:$0xf]
  %v161 = vld [vmem:[%s1 + $0x2f4] sm:$0xff]
  %v162 = vld [vmem:[%s1 + $0x2fc] sm:$0xf]
  %v163 = vld [vmem:[%s1 + $0x300] sm:$0xff]
  %v164 = vld [vmem:[%s1 + $0x308] sm:$0xf]
  %v165 = vld [vmem:[%s1 + $0x30c] sm:$0xff]
  %v166 = vld [vmem:[%s1 + $0x314] sm:$0xf]
  %v167 = vld [vmem:[%s1 + $0x318] sm:$0xff]
  %v168 = vld [vmem:[%s1 + $0x320] sm:$0xf]
  %v169 = vld [vmem:[%s1 + $0x324] sm:$0xff]
  %v170 = vld [vmem:[%s1 + $0x32c] sm:$0xf]
  %v171 = vld [vmem:[%s1 + $0x330] sm:$0xff]
  %v172 = vld [vmem:[%s1 + $0x338] sm:$0xf]
  %v173 = vld [vmem:[%s1 + $0x33c] sm:$0xff]
  %v174 = vld [vmem:[%s1 + $0x344] sm:$0xf]
  %v175 = vld [vmem:[%s1 + $0x348] sm:$0xff]
  %v176 = vld [vmem:[%s1 + $0x350] sm:$0xf]
  %v177 = vld [vmem:[%s1 + $0x354] sm:$0xff]
  %v178 = vld [vmem:[%s1 + $0x35c] sm:$0xf]
  %v179 = vld [vmem:[%s1 + $0x360] sm:$0xff]
  %v180 = vld [vmem:[%s1 + $0x368] sm:$0xf]
  %v181 = vld [vmem:[%s1 + $0x36c] sm:$0xff]
  %v182 = vld [vmem:[%s1 + $0x374] sm:$0xf]
  %v183 = vld [vmem:[%s1 + $0x378] sm:$0xff]
  %v184 = vld [vmem:[%s1 + $0x380] sm:$0xf]
  %v185 = vld [vmem:[%s1 + $0x384] sm:$0xff]
  %v186 = vld [vmem:[%s1 + $0x38c] sm:$0xf]
  %v187 = vld [vmem:[%s1 + $0x390] sm:$0xff]
  %v188 = vld [vmem:[%s1 + $0x398] sm:$0xf]
  %v189 = vld [vmem:[%s1 + $0x39c] sm:$0xff]
  %v190 = vld [vmem:[%s1 + $0x3a4] sm:$0xf]
  %v191 = vld [vmem:[%s1 + $0x3a8] sm:$0xff]
  %v192 = vld [vmem:[%s1 + $0x3b0] sm:$0xf]
  %v193 = vld [vmem:[%s1 + $0x3b4] sm:$0xff]
  %v194 = vld [vmem:[%s1 + $0x3bc] sm:$0xf]
  %v195 = vld [vmem:[%s1 + $0x3c0] sm:$0xff]
  %v196 = vld [vmem:[%s1 + $0x3c8] sm:$0xf]
  %v197 = vld [vmem:[%s1 + $0x3cc] sm:$0xff]
  %v198 = vld [vmem:[%s1 + $0x3d4] sm:$0xf]
  %v199 = vld [vmem:[%s1 + $0x3d8] sm:$0xff]
  %v200 = vld [vmem:[%s1 + $0x3e0] sm:$0xf]
  %v201 = vld [vmem:[%s1 + $0x3e4] sm:$0xff]
  %v202 = vld [vmem:[%s1 + $0x3ec] sm:$0xf]
  %v203 = vld [vmem:[%s1 + $0x3f0] sm:$0xff]
  %v204 = vld [vmem:[%s1 + $0x3f8] sm:$0xf]
  %v205 = vld [vmem:[%s1 + $0x3fc] sm:$0xff]
  %v206 = vld [vmem:[%s1 + $0x404] sm:$0xf]
  %v207 = vld [vmem:[%s1 + $0x408] sm:$0xff]
  %v208 = vld [vmem:[%s1 + $0x410] sm:$0xf]
  %v209 = vld [vmem:[%s1 + $0x414] sm:$0xff]
  %v210 = vld [vmem:[%s1 + $0x41c] sm:$0xf]
  %v211 = vld [vmem:[%s1 + $0x420] sm:$0xff]
  %v212 = vld [vmem:[%s1 + $0x428] sm:$0xf]
  %v213 = vld [vmem:[%s1 + $0x42c] sm:$0xff]
  %v214 = vld [vmem:[%s1 + $0x434] sm:$0xf]
  %v215 = vld [vmem:[%s1 + $0x438] sm:$0xff]
  %v216 = vld [vmem:[%s1 + $0x440] sm:$0xf]
  %v217 = vld [vmem:[%s1 + $0x444] sm:$0xff]
  %v218 = vld [vmem:[%s1 + $0x44c] sm:$0xf]
  %v219 = vld [vmem:[%s1 + $0x450] sm:$0xff]
  %v220 = vld [vmem:[%s1 + $0x458] sm:$0xf]
  %v221 = vld [vmem:[%s1 + $0x45c] sm:$0xff]
  %v222 = vld [vmem:[%s1 + $0x464] sm:$0xf]
  %v223 = vld [vmem:[%s1 + $0x468] sm:$0xff]
  %v224 = vld [vmem:[%s1 + $0x470] sm:$0xf]
  %v225 = vld [vmem:[%s1 + $0x474] sm:$0xff]
  %v226 = vld [vmem:[%s1 + $0x47c] sm:$0xf]
  %v227 = vld [vmem:[%s1 + $0x480] sm:$0xff]
  %v228 = vld [vmem:[%s1 + $0x488] sm:$0xf]
  %v229 = vld [vmem:[%s1 + $0x48c] sm:$0xff]
  %v230 = vld [vmem:[%s1 + $0x494] sm:$0xf]
  %v231 = vld [vmem:[%s2] sm:$0x7]
  %v233 = vlaneseq
  %v234 = vshrl.u32 %v233, 7
  %v235 = vsub.s32 0, %v234
  %v236 = vrot.slane %v231, %v235
  %v237 = vlaneseq
  %v238 = vshrl.u32 %v237, 7
  %v239 = vsub.s32 1, %v238
  %v240 = vrot.slane %v231, %v239
  %v241 = vlaneseq
  %v242 = vshrl.u32 %v241, 7
  %v243 = vsub.s32 2, %v242
  %v244 = vrot.slane %v231, %v243
  %v256 = vunpack.c.l.b16 %v27
  %v257 = vunpack.c.h.b16 %v27
  %v258 = vunpack.c.l.b16 %v28
  %v259 = vunpack.c.h.b16 %v28
  %v260 = vunpack.c.l.b16 %v29
  %v261 = vunpack.c.h.b16 %v29
  %v262 = vunpack.c.l.b16 %v30
  %v263 = vunpack.c.l.b16 %v31
  %v264 = vunpack.c.h.b16 %v31
  %v265 = vunpack.c.l.b16 %v32
  %v266 = vunpack.c.h.b16 %v32
  %v267 = vunpack.c.l.b16 %v33
  %v268 = vunpack.c.h.b16 %v33
  %v269 = vunpack.c.l.b16 %v34
  %v270 = vpack.c.b16 %v263, %v256
  %v271 = vpack.c.b16 %v264, %v257
  %v272 = vpack.c.b16 %v265, %v258
  %v273 = vpack.c.b16 %v266, %v259
  %v274 = vpack.c.b16 %v267, %v260
  %v275 = vpack.c.b16 %v268, %v261
  %v276 = vpack.c.b16 %v269, %v262
  %v479 = vunpack.c.l.b16 %v35
  %v480 = vunpack.c.h.b16 %v35
  %v481 = vunpack.c.l.b16 %v36
  %v482 = vunpack.c.l.b16 %v37
  %v483 = vunpack.c.h.b16 %v37
  %v484 = vunpack.c.l.b16 %v38
  %v485 = vunpack.c.l.b16 %v39
  %v486 = vunpack.c.h.b16 %v39
  %v487 = vunpack.c.l.b16 %v40
  %v488 = vunpack.c.l.b16 %v41
  %v489 = vunpack.c.h.b16 %v41
  %v490 = vunpack.c.l.b16 %v42
  %v491 = vunpack.c.l.b16 %v43
  %v492 = vunpack.c.h.b16 %v43
  %v493 = vunpack.c.l.b16 %v44
  %v494 = vunpack.c.l.b16 %v45
  %v495 = vunpack.c.h.b16 %v45
  %v496 = vunpack.c.l.b16 %v46
  %v497 = vunpack.c.l.b16 %v47
  %v498 = vunpack.c.h.b16 %v47
  %v499 = vunpack.c.l.b16 %v48
  %v500 = vunpack.c.l.b16 %v49
  %v501 = vunpack.c.h.b16 %v49
  %v502 = vunpack.c.l.b16 %v50
  %v503 = vunpack.c.l.b16 %v51
  %v504 = vunpack.c.h.b16 %v51
  %v505 = vunpack.c.l.b16 %v52
  %v506 = vunpack.c.l.b16 %v53
  %v507 = vunpack.c.h.b16 %v53
  %v508 = vunpack.c.l.b16 %v54
  %v509 = vunpack.c.l.b16 %v55
  %v510 = vunpack.c.h.b16 %v55
  %v511 = vunpack.c.l.b16 %v56
  %v512 = vunpack.c.l.b16 %v57
  %v513 = vunpack.c.h.b16 %v57
  %v514 = vunpack.c.l.b16 %v58
  %v515 = vunpack.c.l.b16 %v59
  %v516 = vunpack.c.h.b16 %v59
  %v517 = vunpack.c.l.b16 %v60
  %v518 = vunpack.c.l.b16 %v61
  %v519 = vunpack.c.h.b16 %v61
  %v520 = vunpack.c.l.b16 %v62
  %v521 = vunpack.c.l.b16 %v63
  %v522 = vunpack.c.h.b16 %v63
  %v523 = vunpack.c.l.b16 %v64
  %v524 = vunpack.c.l.b16 %v65
  %v525 = vunpack.c.h.b16 %v65
  %v526 = vunpack.c.l.b16 %v66
  %v527 = vunpack.c.l.b16 %v67
  %v528 = vunpack.c.h.b16 %v67
  %v529 = vunpack.c.l.b16 %v68
  %v530 = vunpack.c.l.b16 %v69
  %v531 = vunpack.c.h.b16 %v69
  %v532 = vunpack.c.l.b16 %v70
  %v533 = vunpack.c.l.b16 %v71
  %v534 = vunpack.c.h.b16 %v71
  %v535 = vunpack.c.l.b16 %v72
  %v536 = vunpack.c.l.b16 %v73
  %v537 = vunpack.c.h.b16 %v73
  %v538 = vunpack.c.l.b16 %v74
  %v539 = vunpack.c.l.b16 %v75
  %v540 = vunpack.c.h.b16 %v75
  %v541 = vunpack.c.l.b16 %v76
  %v542 = vunpack.c.l.b16 %v77
  %v543 = vunpack.c.h.b16 %v77
  %v544 = vunpack.c.l.b16 %v78
  %v545 = vunpack.c.l.b16 %v79
  %v546 = vunpack.c.h.b16 %v79
  %v547 = vunpack.c.l.b16 %v80
  %v548 = vunpack.c.l.b16 %v81
  %v549 = vunpack.c.h.b16 %v81
  %v550 = vunpack.c.l.b16 %v82
  %v551 = vunpack.c.l.b16 %v83
  %v552 = vunpack.c.h.b16 %v83
  %v553 = vunpack.c.l.b16 %v84
  %v554 = vunpack.c.l.b16 %v85
  %v555 = vunpack.c.h.b16 %v85
  %v556 = vunpack.c.l.b16 %v86
  %v557 = vunpack.c.l.b16 %v87
  %v558 = vunpack.c.h.b16 %v87
  %v559 = vunpack.c.l.b16 %v88
  %v560 = vunpack.c.l.b16 %v89
  %v561 = vunpack.c.h.b16 %v89
  %v562 = vunpack.c.l.b16 %v90
  %v563 = vunpack.c.l.b16 %v91
  %v564 = vunpack.c.h.b16 %v91
  %v565 = vunpack.c.l.b16 %v92
  %v566 = vunpack.c.l.b16 %v93
  %v567 = vunpack.c.h.b16 %v93
  %v568 = vunpack.c.l.b16 %v94
  %v569 = vunpack.c.l.b16 %v95
  %v570 = vunpack.c.h.b16 %v95
  %v571 = vunpack.c.l.b16 %v96
  %v572 = vunpack.c.l.b16 %v97
  %v573 = vunpack.c.h.b16 %v97
  %v574 = vunpack.c.l.b16 %v98
  %v575 = vunpack.c.l.b16 %v99
  %v576 = vunpack.c.h.b16 %v99
  %v577 = vunpack.c.l.b16 %v100
  %v578 = vunpack.c.l.b16 %v101
  %v579 = vunpack.c.h.b16 %v101
  %v580 = vunpack.c.l.b16 %v102
  %v581 = vunpack.c.l.b16 %v103
  %v582 = vunpack.c.h.b16 %v103
  %v583 = vunpack.c.l.b16 %v104
  %v584 = vunpack.c.l.b16 %v105
  %v585 = vunpack.c.h.b16 %v105
  %v586 = vunpack.c.l.b16 %v106
  %v587 = vunpack.c.l.b16 %v107
  %v588 = vunpack.c.h.b16 %v107
  %v589 = vunpack.c.l.b16 %v108
  %v590 = vunpack.c.l.b16 %v109
  %v591 = vunpack.c.h.b16 %v109
  %v592 = vunpack.c.l.b16 %v110
  %v593 = vunpack.c.l.b16 %v111
  %v594 = vunpack.c.h.b16 %v111
  %v595 = vunpack.c.l.b16 %v112
  %v596 = vunpack.c.l.b16 %v113
  %v597 = vunpack.c.h.b16 %v113
  %v598 = vunpack.c.l.b16 %v114
  %v599 = vunpack.c.l.b16 %v115
  %v600 = vunpack.c.h.b16 %v115
  %v601 = vunpack.c.l.b16 %v116
  %v602 = vunpack.c.l.b16 %v117
  %v603 = vunpack.c.h.b16 %v117
  %v604 = vunpack.c.l.b16 %v118
  %v605 = vunpack.c.l.b16 %v119
  %v606 = vunpack.c.h.b16 %v119
  %v607 = vunpack.c.l.b16 %v120
  %v608 = vunpack.c.l.b16 %v121
  %v609 = vunpack.c.h.b16 %v121
  %v610 = vunpack.c.l.b16 %v122
  %v611 = vunpack.c.l.b16 %v123
  %v612 = vunpack.c.h.b16 %v123
  %v613 = vunpack.c.l.b16 %v124
  %v614 = vunpack.c.l.b16 %v125
  %v615 = vunpack.c.h.b16 %v125
  %v616 = vunpack.c.l.b16 %v126
  %v617 = vunpack.c.l.b16 %v127
  %v618 = vunpack.c.h.b16 %v127
  %v619 = vunpack.c.l.b16 %v128
  %v620 = vunpack.c.l.b16 %v129
  %v621 = vunpack.c.h.b16 %v129
  %v622 = vunpack.c.l.b16 %v130
  %v623 = vunpack.c.l.b16 %v131
  %v624 = vunpack.c.h.b16 %v131
  %v625 = vunpack.c.l.b16 %v132
  %v626 = vunpack.c.l.b16 %v133
  %v627 = vunpack.c.h.b16 %v133
  %v628 = vunpack.c.l.b16 %v134
  %v629 = vunpack.c.l.b16 %v135
  %v630 = vunpack.c.h.b16 %v135
  %v631 = vunpack.c.l.b16 %v136
  %v632 = vunpack.c.l.b16 %v137
  %v633 = vunpack.c.h.b16 %v137
  %v634 = vunpack.c.l.b16 %v138
  %v635 = vunpack.c.l.b16 %v139
  %v636 = vunpack.c.h.b16 %v139
  %v637 = vunpack.c.l.b16 %v140
  %v638 = vunpack.c.l.b16 %v141
  %v639 = vunpack.c.h.b16 %v141
  %v640 = vunpack.c.l.b16 %v142
  %v641 = vunpack.c.l.b16 %v143
  %v642 = vunpack.c.h.b16 %v143
  %v643 = vunpack.c.l.b16 %v144
  %v644 = vunpack.c.l.b16 %v145
  %v645 = vunpack.c.h.b16 %v145
  %v646 = vunpack.c.l.b16 %v146
  %v647 = vunpack.c.l.b16 %v147
  %v648 = vunpack.c.h.b16 %v147
  %v649 = vunpack.c.l.b16 %v148
  %v650 = vunpack.c.l.b16 %v149
  %v651 = vunpack.c.h.b16 %v149
  %v652 = vunpack.c.l.b16 %v150
  %v653 = vunpack.c.l.b16 %v151
  %v654 = vunpack.c.h.b16 %v151
  %v655 = vunpack.c.l.b16 %v152
  %v656 = vunpack.c.l.b16 %v153
  %v657 = vunpack.c.h.b16 %v153
  %v658 = vunpack.c.l.b16 %v154
  %v659 = vunpack.c.l.b16 %v155
  %v660 = vunpack.c.h.b16 %v155
  %v661 = vunpack.c.l.b16 %v156
  %v662 = vunpack.c.l.b16 %v157
  %v663 = vunpack.c.h.b16 %v157
  %v664 = vunpack.c.l.b16 %v158
  %v665 = vunpack.c.l.b16 %v159
  %v666 = vunpack.c.h.b16 %v159
  %v667 = vunpack.c.l.b16 %v160
  %v668 = vunpack.c.l.b16 %v161
  %v669 = vunpack.c.h.b16 %v161
  %v670 = vunpack.c.l.b16 %v162
  %v671 = vunpack.c.l.b16 %v163
  %v672 = vunpack.c.h.b16 %v163
  %v673 = vunpack.c.l.b16 %v164
  %v674 = vunpack.c.l.b16 %v165
  %v675 = vunpack.c.h.b16 %v165
  %v676 = vunpack.c.l.b16 %v166
  %v677 = vunpack.c.l.b16 %v167
  %v678 = vunpack.c.h.b16 %v167
  %v679 = vunpack.c.l.b16 %v168
  %v680 = vunpack.c.l.b16 %v169
  %v681 = vunpack.c.h.b16 %v169
  %v682 = vunpack.c.l.b16 %v170
  %v683 = vunpack.c.l.b16 %v171
  %v684 = vunpack.c.h.b16 %v171
  %v685 = vunpack.c.l.b16 %v172
  %v686 = vunpack.c.l.b16 %v173
  %v687 = vunpack.c.h.b16 %v173
  %v688 = vunpack.c.l.b16 %v174
  %v689 = vunpack.c.l.b16 %v175
  %v690 = vunpack.c.h.b16 %v175
  %v691 = vunpack.c.l.b16 %v176
  %v692 = vunpack.c.l.b16 %v177
  %v693 = vunpack.c.h.b16 %v177
  %v694 = vunpack.c.l.b16 %v178
  %v695 = vunpack.c.l.b16 %v179
  %v696 = vunpack.c.h.b16 %v179
  %v697 = vunpack.c.l.b16 %v180
  %v698 = vunpack.c.l.b16 %v181
  %v699 = vunpack.c.h.b16 %v181
  %v700 = vunpack.c.l.b16 %v182
  %v701 = vunpack.c.l.b16 %v183
  %v702 = vunpack.c.h.b16 %v183
  %v703 = vunpack.c.l.b16 %v184
  %v704 = vunpack.c.l.b16 %v185
  %v705 = vunpack.c.h.b16 %v185
  %v706 = vunpack.c.l.b16 %v186
  %v707 = vunpack.c.l.b16 %v187
  %v708 = vunpack.c.h.b16 %v187
  %v709 = vunpack.c.l.b16 %v188
  %v710 = vunpack.c.l.b16 %v189
  %v711 = vunpack.c.h.b16 %v189
  %v712 = vunpack.c.l.b16 %v190
  %v713 = vunpack.c.l.b16 %v191
  %v714 = vunpack.c.h.b16 %v191
  %v715 = vunpack.c.l.b16 %v192
  %v716 = vunpack.c.l.b16 %v193
  %v717 = vunpack.c.h.b16 %v193
  %v718 = vunpack.c.l.b16 %v194
  %v719 = vunpack.c.l.b16 %v195
  %v720 = vunpack.c.h.b16 %v195
  %v721 = vunpack.c.l.b16 %v196
  %v722 = vunpack.c.l.b16 %v197
  %v723 = vunpack.c.h.b16 %v197
  %v724 = vunpack.c.l.b16 %v198
  %v725 = vunpack.c.l.b16 %v199
  %v726 = vunpack.c.h.b16 %v199
  %v727 = vunpack.c.l.b16 %v200
  %v728 = vunpack.c.l.b16 %v201
  %v729 = vunpack.c.h.b16 %v201
  %v730 = vunpack.c.l.b16 %v202
  %v731 = vunpack.c.l.b16 %v203
  %v732 = vunpack.c.h.b16 %v203
  %v733 = vunpack.c.l.b16 %v204
  %v734 = vunpack.c.l.b16 %v205
  %v735 = vunpack.c.h.b16 %v205
  %v736 = vunpack.c.l.b16 %v206
  %v737 = vunpack.c.l.b16 %v207
  %v738 = vunpack.c.h.b16 %v207
  %v739 = vunpack.c.l.b16 %v208
  %v740 = vunpack.c.l.b16 %v209
  %v741 = vunpack.c.h.b16 %v209
  %v742 = vunpack.c.l.b16 %v210
  %v743 = vunpack.c.l.b16 %v211
  %v744 = vunpack.c.h.b16 %v211
  %v745 = vunpack.c.l.b16 %v212
  %v746 = vunpack.c.l.b16 %v213
  %v747 = vunpack.c.h.b16 %v213
  %v748 = vunpack.c.l.b16 %v214
  %v749 = vunpack.c.l.b16 %v215
  %v750 = vunpack.c.h.b16 %v215
  %v751 = vunpack.c.l.b16 %v216
  %v752 = vunpack.c.l.b16 %v217
  %v753 = vunpack.c.h.b16 %v217
  %v754 = vunpack.c.l.b16 %v218
  %v755 = vunpack.c.l.b16 %v219
  %v756 = vunpack.c.h.b16 %v219
  %v757 = vunpack.c.l.b16 %v220
  %v758 = vunpack.c.l.b16 %v221
  %v759 = vunpack.c.h.b16 %v221
  %v760 = vunpack.c.l.b16 %v222
  %v761 = vunpack.c.l.b16 %v223
  %v762 = vunpack.c.h.b16 %v223
  %v763 = vunpack.c.l.b16 %v224
  %v764 = vunpack.c.l.b16 %v225
  %v765 = vunpack.c.h.b16 %v225
  %v766 = vunpack.c.l.b16 %v226
  %v767 = vunpack.c.l.b16 %v227
  %v768 = vunpack.c.h.b16 %v227
  %v769 = vunpack.c.l.b16 %v228
  %v770 = vunpack.c.l.b16 %v229
  %v771 = vunpack.c.h.b16 %v229
  %v772 = vunpack.c.l.b16 %v230
  %v773 = vpack.c.b16 %v482, %v479
  %v774 = vpack.c.b16 %v483, %v480
  %v775 = vpack.c.b16 %v484, %v481
  %v776 = vpack.c.b16 %v488, %v485
  %v777 = vpack.c.b16 %v489, %v486
  %v778 = vpack.c.b16 %v490, %v487
  %v779 = vpack.c.b16 %v494, %v491
  %v780 = vpack.c.b16 %v495, %v492
  %v781 = vpack.c.b16 %v496, %v493
  %v782 = vpack.c.b16 %v500, %v497
  %v783 = vpack.c.b16 %v501, %v498
  %v784 = vpack.c.b16 %v502, %v499
  %v785 = vpack.c.b16 %v506, %v503
  %v786 = vpack.c.b16 %v507, %v504
  %v787 = vpack.c.b16 %v508, %v505
  %v788 = vpack.c.b16 %v512, %v509
  %v789 = vpack.c.b16 %v513, %v510
  %v790 = vpack.c.b16 %v514, %v511
  %v791 = vpack.c.b16 %v518, %v515
  %v792 = vpack.c.b16 %v519, %v516
  %v793 = vpack.c.b16 %v520, %v517
  %v794 = vpack.c.b16 %v524, %v521
  %v795 = vpack.c.b16 %v525, %v522
  %v796 = vpack.c.b16 %v526, %v523
  %v797 = vpack.c.b16 %v530, %v527
  %v798 = vpack.c.b16 %v531, %v528
  %v799 = vpack.c.b16 %v532, %v529
  %v800 = vpack.c.b16 %v536, %v533
  %v801 = vpack.c.b16 %v537, %v534
  %v802 = vpack.c.b16 %v538, %v535
  %v803 = vpack.c.b16 %v542, %v539
  %v804 = vpack.c.b16 %v543, %v540
  %v805 = vpack.c.b16 %v544, %v541
  %v806 = vpack.c.b16 %v548, %v545
  %v807 = vpack.c.b16 %v549, %v546
  %v808 = vpack.c.b16 %v550, %v547
  %v809 = vpack.c.b16 %v554, %v551
  %v810 = vpack.c.b16 %v555, %v552
  %v811 = vpack.c.b16 %v556, %v553
  %v812 = vpack.c.b16 %v560, %v557
  %v813 = vpack.c.b16 %v561, %v558
  %v814 = vpack.c.b16 %v562, %v559
  %v815 = vpack.c.b16 %v566, %v563
  %v816 = vpack.c.b16 %v567, %v564
  %v817 = vpack.c.b16 %v568, %v565
  %v818 = vpack.c.b16 %v572, %v569
  %v819 = vpack.c.b16 %v573, %v570
  %v820 = vpack.c.b16 %v574, %v571
  %v821 = vpack.c.b16 %v578, %v575
  %v822 = vpack.c.b16 %v579, %v576
  %v823 = vpack.c.b16 %v580, %v577
  %v824 = vpack.c.b16 %v584, %v581
  %v825 = vpack.c.b16 %v585, %v582
  %v826 = vpack.c.b16 %v586, %v583
  %v827 = vpack.c.b16 %v590, %v587
  %v828 = vpack.c.b16 %v591, %v588
  %v829 = vpack.c.b16 %v592, %v589
  %v830 = vpack.c.b16 %v596, %v593
  %v831 = vpack.c.b16 %v597, %v594
  %v832 = vpack.c.b16 %v598, %v595
  %v833 = vpack.c.b16 %v602, %v599
  %v834 = vpack.c.b16 %v603, %v600
  %v835 = vpack.c.b16 %v604, %v601
  %v836 = vpack.c.b16 %v608, %v605
  %v837 = vpack.c.b16 %v609, %v606
  %v838 = vpack.c.b16 %v610, %v607
  %v839 = vpack.c.b16 %v614, %v611
  %v840 = vpack.c.b16 %v615, %v612
  %v841 = vpack.c.b16 %v616, %v613
  %v842 = vpack.c.b16 %v620, %v617
  %v843 = vpack.c.b16 %v621, %v618
  %v844 = vpack.c.b16 %v622, %v619
  %v845 = vpack.c.b16 %v626, %v623
  %v846 = vpack.c.b16 %v627, %v624
  %v847 = vpack.c.b16 %v628, %v625
  %v848 = vpack.c.b16 %v632, %v629
  %v849 = vpack.c.b16 %v633, %v630
  %v850 = vpack.c.b16 %v634, %v631
  %v851 = vpack.c.b16 %v638, %v635
  %v852 = vpack.c.b16 %v639, %v636
  %v853 = vpack.c.b16 %v640, %v637
  %v854 = vpack.c.b16 %v644, %v641
  %v855 = vpack.c.b16 %v645, %v642
  %v856 = vpack.c.b16 %v646, %v643
  %v857 = vpack.c.b16 %v650, %v647
  %v858 = vpack.c.b16 %v651, %v648
  %v859 = vpack.c.b16 %v652, %v649
  %v860 = vpack.c.b16 %v656, %v653
  %v861 = vpack.c.b16 %v657, %v654
  %v862 = vpack.c.b16 %v658, %v655
  %v863 = vpack.c.b16 %v662, %v659
  %v864 = vpack.c.b16 %v663, %v660
  %v865 = vpack.c.b16 %v664, %v661
  %v866 = vpack.c.b16 %v668, %v665
  %v867 = vpack.c.b16 %v669, %v666
  %v868 = vpack.c.b16 %v670, %v667
  %v869 = vpack.c.b16 %v674, %v671
  %v870 = vpack.c.b16 %v675, %v672
  %v871 = vpack.c.b16 %v676, %v673
  %v872 = vpack.c.b16 %v680, %v677
  %v873 = vpack.c.b16 %v681, %v678
  %v874 = vpack.c.b16 %v682, %v679
  %v875 = vpack.c.b16 %v686, %v683
  %v876 = vpack.c.b16 %v687, %v684
  %v877 = vpack.c.b16 %v688, %v685
  %v878 = vpack.c.b16 %v692, %v689
  %v879 = vpack.c.b16 %v693, %v690
  %v880 = vpack.c.b16 %v694, %v691
  %v881 = vpack.c.b16 %v698, %v695
  %v882 = vpack.c.b16 %v699, %v696
  %v883 = vpack.c.b16 %v700, %v697
  %v884 = vpack.c.b16 %v704, %v701
  %v885 = vpack.c.b16 %v705, %v702
  %v886 = vpack.c.b16 %v706, %v703
  %v887 = vpack.c.b16 %v710, %v707
  %v888 = vpack.c.b16 %v711, %v708
  %v889 = vpack.c.b16 %v712, %v709
  %v890 = vpack.c.b16 %v716, %v713
  %v891 = vpack.c.b16 %v717, %v714
  %v892 = vpack.c.b16 %v718, %v715
  %v893 = vpack.c.b16 %v722, %v719
  %v894 = vpack.c.b16 %v723, %v720
  %v895 = vpack.c.b16 %v724, %v721
  %v896 = vpack.c.b16 %v728, %v725
  %v897 = vpack.c.b16 %v729, %v726
  %v898 = vpack.c.b16 %v730, %v727
  %v899 = vpack.c.b16 %v734, %v731
  %v900 = vpack.c.b16 %v735, %v732
  %v901 = vpack.c.b16 %v736, %v733
  %v902 = vpack.c.b16 %v740, %v737
  %v903 = vpack.c.b16 %v741, %v738
  %v904 = vpack.c.b16 %v742, %v739
  %v905 = vpack.c.b16 %v746, %v743
  %v906 = vpack.c.b16 %v747, %v744
  %v907 = vpack.c.b16 %v748, %v745
  %v908 = vpack.c.b16 %v752, %v749
  %v909 = vpack.c.b16 %v753, %v750
  %v910 = vpack.c.b16 %v754, %v751
  %v911 = vpack.c.b16 %v758, %v755
  %v912 = vpack.c.b16 %v759, %v756
  %v913 = vpack.c.b16 %v760, %v757
  %v914 = vpack.c.b16 %v764, %v761
  %v915 = vpack.c.b16 %v765, %v762
  %v916 = vpack.c.b16 %v766, %v763
  %v917 = vpack.c.b16 %v770, %v767
  %v918 = vpack.c.b16 %v771, %v768
  %v919 = vpack.c.b16 %v772, %v769
  %vm1067 = vcmask 130048
  %v1069 = vsel %vm1067, %v276, 0
  %1071 = vmatprep.subr.bf16.mxu0 %v795
  %1072 = vmatpush1.bf16.msra.mxu0 %v794
  %1073 = vmatprep.subr.bf16.mxu0 %v792
  %1074 = vmatpush1.bf16.msra.mxu0 %v791
  %1075 = vmatprep.subr.bf16.mxu0 %v789
  %1076 = vmatpush1.bf16.msra.mxu0 %v788
  %1077 = vmatprep.subr.bf16.mxu0 %v786
  %1078 = vmatpush1.bf16.msra.mxu0 %v785
  %1079 = vmatprep.subr.bf16.mxu0 %v783
  %1080 = vmatpush1.bf16.msra.mxu0 %v782
  %1081 = vmatprep.subr.bf16.mxu0 %v780
  %1082 = vmatpush1.bf16.msra.mxu0 %v779
  %1083 = vmatprep.subr.bf16.mxu0 %v777
  %1084 = vmatpush1.bf16.msra.mxu0 %v776
  %1085 = vmatprep.subr.bf16.mxu0 %v774
  %1086 = vmatpush1.bf16.msra.mxu0 %v773
  %1087 = vmatprep.subr.bf16.mxu0 %v819
  %1088 = vmatpush2.bf16.msra.mxu0 %v818
  %1089 = vmatprep.subr.bf16.mxu0 %v816
  %1090 = vmatpush2.bf16.msra.mxu0 %v815
  %1091 = vmatprep.subr.bf16.mxu0 %v813
  %1092 = vmatpush2.bf16.msra.mxu0 %v812
  %1093 = vmatprep.subr.bf16.mxu0 %v810
  %1094 = vmatpush2.bf16.msra.mxu0 %v809
  %1095 = vmatprep.subr.bf16.mxu0 %v807
  %1096 = vmatpush2.bf16.msra.mxu0 %v806
  %1097 = vmatprep.subr.bf16.mxu0 %v804
  %1098 = vmatpush2.bf16.msra.mxu0 %v803
  %1099 = vmatprep.subr.bf16.mxu0 %v801
  %1100 = vmatpush2.bf16.msra.mxu0 %v800
  %1101 = vmatprep.subr.bf16.mxu0 %v798
  %1102 = vmatpush2.bf16.msra.mxu0 %v797
  %1103 = vmatprep.mubr.bf16.mxu0 %v271
  %1104 = vmatmul.mubr.bf16.gmra.mxu0 %v270
  %v1105 = vpop.f32.mrf.mxu0
  %v1106 = vadd.f32 %v236, %v1105
  %v1107 = vpop.f32.mrf.mxu0
  %v1108 = vadd.f32 %v240, %v1107
  %v1109 = vpop.f32.mrf.mxu0
  %v1110 = vadd.f32 %v236, %v1109
  %v1111 = vpop.f32.mrf.mxu0
  %v1112 = vadd.f32 %v240, %v1111
  %1113 = vdwg.mxu0
  %1114 = vmatprep.subr.bf16.mxu0 %v843
  %1115 = vmatpush1.bf16.msra.mxu0 %v842
  %1116 = vmatprep.subr.bf16.mxu0 %v840
  %1117 = vmatpush1.bf16.msra.mxu0 %v839
  %1118 = vmatprep.subr.bf16.mxu0 %v837
  %1119 = vmatpush1.bf16.msra.mxu0 %v836
  %1120 = vmatprep.subr.bf16.mxu0 %v834
  %1121 = vmatpush1.bf16.msra.mxu0 %v833
  %1122 = vmatprep.subr.bf16.mxu0 %v831
  %1123 = vmatpush1.bf16.msra.mxu0 %v830
  %1124 = vmatprep.subr.bf16.mxu0 %v828
  %1125 = vmatpush1.bf16.msra.mxu0 %v827
  %1126 = vmatprep.subr.bf16.mxu0 %v825
  %1127 = vmatpush1.bf16.msra.mxu0 %v824
  %1128 = vmatprep.subr.bf16.mxu0 %v822
  %1129 = vmatpush1.bf16.msra.mxu0 %v821
  %1130 = vmatprep.subr.bf16.mxu0 %v867
  %1131 = vmatpush2.bf16.msra.mxu0 %v866
  %1132 = vmatprep.subr.bf16.mxu0 %v864
  %1133 = vmatpush2.bf16.msra.mxu0 %v863
  %1134 = vmatprep.subr.bf16.mxu0 %v861
  %1135 = vmatpush2.bf16.msra.mxu0 %v860
  %1136 = vmatprep.subr.bf16.mxu0 %v858
  %1137 = vmatpush2.bf16.msra.mxu0 %v857
  %1138 = vmatprep.subr.bf16.mxu0 %v855
  %1139 = vmatpush2.bf16.msra.mxu0 %v854
  %1140 = vmatprep.subr.bf16.mxu0 %v852
  %1141 = vmatpush2.bf16.msra.mxu0 %v851
  %1142 = vmatprep.subr.bf16.mxu0 %v849
  %1143 = vmatpush2.bf16.msra.mxu0 %v848
  %1144 = vmatprep.subr.bf16.mxu0 %v846
  %1145 = vmatpush2.bf16.msra.mxu0 %v845
  %1146 = vmatprep.mubr.bf16.mxu0 %v273
  %1147 = vmatmul.mubr.bf16.gmra.mxu0 %v272
  %v1148 = vpop.f32.mrf.mxu0
  %v1149 = vadd.f32 %v1106, %v1148
  %v1150 = vpop.f32.mrf.mxu0
  %v1151 = vadd.f32 %v1108, %v1150
  %v1152 = vpop.f32.mrf.mxu0
  %v1153 = vadd.f32 %v1110, %v1152
  %v1154 = vpop.f32.mrf.mxu0
  %v1155 = vadd.f32 %v1112, %v1154
  %1156 = vdwg.mxu0
  %1157 = vmatprep.subr.bf16.mxu0 %v891
  %1158 = vmatpush1.bf16.msra.mxu0 %v890
  %1159 = vmatprep.subr.bf16.mxu0 %v888
  %1160 = vmatpush1.bf16.msra.mxu0 %v887
  %1161 = vmatprep.subr.bf16.mxu0 %v885
  %1162 = vmatpush1.bf16.msra.mxu0 %v884
  %1163 = vmatprep.subr.bf16.mxu0 %v882
  %1164 = vmatpush1.bf16.msra.mxu0 %v881
  %1165 = vmatprep.subr.bf16.mxu0 %v879
  %1166 = vmatpush1.bf16.msra.mxu0 %v878
  %1167 = vmatprep.subr.bf16.mxu0 %v876
  %1168 = vmatpush1.bf16.msra.mxu0 %v875
  %1169 = vmatprep.subr.bf16.mxu0 %v873
  %1170 = vmatpush1.bf16.msra.mxu0 %v872
  %1171 = vmatprep.subr.bf16.mxu0 %v870
  %1172 = vmatpush1.bf16.msra.mxu0 %v869
  %1173 = vmatprep.subr.bf16.mxu0 %v915
  %1174 = vmatpush2.bf16.msra.mxu0 %v914
  %1175 = vmatprep.subr.bf16.mxu0 %v912
  %1176 = vmatpush2.bf16.msra.mxu0 %v911
  %1177 = vmatprep.subr.bf16.mxu0 %v909
  %1178 = vmatpush2.bf16.msra.mxu0 %v908
  %1179 = vmatprep.subr.bf16.mxu0 %v906
  %1180 = vmatpush2.bf16.msra.mxu0 %v905
  %1181 = vmatprep.subr.bf16.mxu0 %v903
  %1182 = vmatpush2.bf16.msra.mxu0 %v902
  %1183 = vmatprep.subr.bf16.mxu0 %v900
  %1184 = vmatpush2.bf16.msra.mxu0 %v899
  %1185 = vmatprep.subr.bf16.mxu0 %v897
  %1186 = vmatpush2.bf16.msra.mxu0 %v896
  %1187 = vmatprep.subr.bf16.mxu0 %v894
  %1188 = vmatpush2.bf16.msra.mxu0 %v893
  %1189 = vmatprep.mubr.bf16.mxu0 %v275
  %1190 = vmatmul.mubr.bf16.gmra.mxu0 %v274
  %v1191 = vpop.f32.mrf.mxu0
  %v1192 = vadd.f32 %v1149, %v1191
  %v1193 = vpop.f32.mrf.mxu0
  %v1194 = vadd.f32 %v1151, %v1193
  %v1195 = vpop.f32.mrf.mxu0
  %v1196 = vadd.f32 %v1153, %v1195
  %v1197 = vpop.f32.mrf.mxu0
  %v1198 = vadd.f32 %v1155, %v1197
  %1199 = vdwg.mxu0
  %1200 = vmatprep.subr.bf16.mxu0 0
  %1201 = vmatpush1.bf16.msra.mxu0 0
  %1202 = vmatprep.subr.bf16.mxu0 0
  %1203 = vmatpush1.bf16.msra.mxu0 0
  %1204 = vmatprep.subr.bf16.mxu0 0
  %1205 = vmatpush1.bf16.msra.mxu0 0
  %1206 = vmatprep.subr.bf16.mxu0 0
  %1207 = vmatpush1.bf16.msra.mxu0 0
  %1208 = vmatprep.subr.bf16.mxu0 0
  %1209 = vmatpush1.bf16.msra.mxu0 0
  %1210 = vmatprep.subr.bf16.mxu0 0
  %1211 = vmatpush1.bf16.msra.mxu0 0
  %1212 = vmatprep.subr.bf16.mxu0 0
  %1213 = vmatpush1.bf16.msra.mxu0 0
  %1214 = vmatprep.subr.bf16.mxu0 %v918
  %1215 = vmatpush1.bf16.msra.mxu0 %v917
  %1216 = vmatprep.subr.bf16.mxu0 0
  %1217 = vmatpush2.bf16.msra.mxu0 0
  %1218 = vmatprep.subr.bf16.mxu0 0
  %1219 = vmatpush2.bf16.msra.mxu0 0
  %1220 = vmatprep.subr.bf16.mxu0 0
  %1221 = vmatpush2.bf16.msra.mxu0 0
  %1222 = vmatprep.subr.bf16.mxu0 0
  %1223 = vmatpush2.bf16.msra.mxu0 0
  %1224 = vmatprep.subr.bf16.mxu0 0
  %1225 = vmatpush2.bf16.msra.mxu0 0
  %1226 = vmatprep.subr.bf16.mxu0 0
  %1227 = vmatpush2.bf16.msra.mxu0 0
  %1228 = vmatprep.subr.bf16.mxu0 0
  %1229 = vmatpush2.bf16.msra.mxu0 0
  %1230 = vmatprep.subr.bf16.mxu0 0
  %1231 = vmatpush2.bf16.msra.mxu0 0
  %1232 = vmatprep.mubr.bf16.mxu0 0
  %1233 = vmatmul.mubr.bf16.gmra.mxu0 %v1069
  %v1234 = vpop.f32.mrf.mxu0
  %v1235 = vadd.f32 %v1192, %v1234
  %v1236 = vpop.f32.mrf.mxu0
  %v1237 = vadd.f32 %v1194, %v1236
  %v1238 = vpop.f32.mrf.mxu0
  %v1239 = vadd.f32 %v1196, %v1238
  %v1240 = vpop.f32.mrf.mxu0
  %v1241 = vadd.f32 %v1198, %v1240
  %1242 = vdwg.mxu0
  %1243 = vmatprep.subr.bf16.mxu0 0
  %1244 = vmatpush1.bf16.msra.mxu0 %v796
  %1245 = vmatprep.subr.bf16.mxu0 0
  %1246 = vmatpush1.bf16.msra.mxu0 %v793
  %1247 = vmatprep.subr.bf16.mxu0 0
  %1248 = vmatpush1.bf16.msra.mxu0 %v790
  %1249 = vmatprep.subr.bf16.mxu0 0
  %1250 = vmatpush1.bf16.msra.mxu0 %v787
  %1251 = vmatprep.subr.bf16.mxu0 0
  %1252 = vmatpush1.bf16.msra.mxu0 %v784
  %1253 = vmatprep.subr.bf16.mxu0 0
  %1254 = vmatpush1.bf16.msra.mxu0 %v781
  %1255 = vmatprep.subr.bf16.mxu0 0
  %1256 = vmatpush1.bf16.msra.mxu0 %v778
  %1257 = vmatprep.subr.bf16.mxu0 0
  %1258 = vmatpush1.bf16.msra.mxu0 %v775
  %1259 = vmatprep.subr.bf16.mxu0 0
  %1260 = vmatpush2.bf16.msra.mxu0 %v820
  %1261 = vmatprep.subr.bf16.mxu0 0
  %1262 = vmatpush2.bf16.msra.mxu0 %v817
  %1263 = vmatprep.subr.bf16.mxu0 0
  %1264 = vmatpush2.bf16.msra.mxu0 %v814
  %1265 = vmatprep.subr.bf16.mxu0 0
  %1266 = vmatpush2.bf16.msra.mxu0 %v811
  %1267 = vmatprep.subr.bf16.mxu0 0
  %1268 = vmatpush2.bf16.msra.mxu0 %v808
  %1269 = vmatprep.subr.bf16.mxu0 0
  %1270 = vmatpush2.bf16.msra.mxu0 %v805
  %1271 = vmatprep.subr.bf16.mxu0 0
  %1272 = vmatpush2.bf16.msra.mxu0 %v802
  %1273 = vmatprep.subr.bf16.mxu0 0
  %1274 = vmatpush2.bf16.msra.mxu0 %v799
  %1275 = vmatprep.mubr.bf16.mxu0 %v271
  %1276 = vmatmul.mubr.bf16.gmra.mxu0 %v270
  %v1277 = vpop.f32.mrf.mxu0
  %v1278 = vadd.f32 %v244, %v1277
  %v1279 = vpop.f32.mrf.mxu0
  %v1280 = vpop.f32.mrf.mxu0
  %v1281 = vadd.f32 %v244, %v1280
  %v1282 = vpop.f32.mrf.mxu0
  %1283 = vdwg.mxu0
  %1284 = vmatprep.subr.bf16.mxu0 0
  %1285 = vmatpush1.bf16.msra.mxu0 %v844
  %1286 = vmatprep.subr.bf16.mxu0 0
  %1287 = vmatpush1.bf16.msra.mxu0 %v841
  %1288 = vmatprep.subr.bf16.mxu0 0
  %1289 = vmatpush1.bf16.msra.mxu0 %v838
  %1290 = vmatprep.subr.bf16.mxu0 0
  %1291 = vmatpush1.bf16.msra.mxu0 %v835
  %1292 = vmatprep.subr.bf16.mxu0 0
  %1293 = vmatpush1.bf16.msra.mxu0 %v832
  %1294 = vmatprep.subr.bf16.mxu0 0
  %1295 = vmatpush1.bf16.msra.mxu0 %v829
  %1296 = vmatprep.subr.bf16.mxu0 0
  %1297 = vmatpush1.bf16.msra.mxu0 %v826
  %1298 = vmatprep.subr.bf16.mxu0 0
  %1299 = vmatpush1.bf16.msra.mxu0 %v823
  %1300 = vmatprep.subr.bf16.mxu0 0
  %1301 = vmatpush2.bf16.msra.mxu0 %v868
  %1302 = vmatprep.subr.bf16.mxu0 0
  %1303 = vmatpush2.bf16.msra.mxu0 %v865
  %1304 = vmatprep.subr.bf16.mxu0 0
  %1305 = vmatpush2.bf16.msra.mxu0 %v862
  %1306 = vmatprep.subr.bf16.mxu0 0
  %1307 = vmatpush2.bf16.msra.mxu0 %v859
  %1308 = vmatprep.subr.bf16.mxu0 0
  %1309 = vmatpush2.bf16.msra.mxu0 %v856
  %1310 = vmatprep.subr.bf16.mxu0 0
  %1311 = vmatpush2.bf16.msra.mxu0 %v853
  %1312 = vmatprep.subr.bf16.mxu0 0
  %1313 = vmatpush2.bf16.msra.mxu0 %v850
  %1314 = vmatprep.subr.bf16.mxu0 0
  %1315 = vmatpush2.bf16.msra.mxu0 %v847
  %1316 = vmatprep.mubr.bf16.mxu0 %v273
  %1317 = vmatmul.mubr.bf16.gmra.mxu0 %v272
  %v1318 = vpop.f32.mrf.mxu0
  %v1319 = vadd.f32 %v1278, %v1318
  %v1320 = vpop.f32.mrf.mxu0
  %v1321 = vpop.f32.mrf.mxu0
  %v1322 = vadd.f32 %v1281, %v1321
  %v1323 = vpop.f32.mrf.mxu0
  %1324 = vdwg.mxu0
  %1325 = vmatprep.subr.bf16.mxu0 0
  %1326 = vmatpush1.bf16.msra.mxu0 %v892
  %1327 = vmatprep.subr.bf16.mxu0 0
  %1328 = vmatpush1.bf16.msra.mxu0 %v889
  %1329 = vmatprep.subr.bf16.mxu0 0
  %1330 = vmatpush1.bf16.msra.mxu0 %v886
  %1331 = vmatprep.subr.bf16.mxu0 0
  %1332 = vmatpush1.bf16.msra.mxu0 %v883
  %1333 = vmatprep.subr.bf16.mxu0 0
  %1334 = vmatpush1.bf16.msra.mxu0 %v880
  %1335 = vmatprep.subr.bf16.mxu0 0
  %1336 = vmatpush1.bf16.msra.mxu0 %v877
  %1337 = vmatprep.subr.bf16.mxu0 0
  %1338 = vmatpush1.bf16.msra.mxu0 %v874
  %1339 = vmatprep.subr.bf16.mxu0 0
  %1340 = vmatpush1.bf16.msra.mxu0 %v871
  %1341 = vmatprep.subr.bf16.mxu0 0
  %1342 = vmatpush2.bf16.msra.mxu0 %v916
  %1343 = vmatprep.subr.bf16.mxu0 0
  %1344 = vmatpush2.bf16.msra.mxu0 %v913
  %1345 = vmatprep.subr.bf16.mxu0 0
  %1346 = vmatpush2.bf16.msra.mxu0 %v910
  %1347 = vmatprep.subr.bf16.mxu0 0
  %1348 = vmatpush2.bf16.msra.mxu0 %v907
  %1349 = vmatprep.subr.bf16.mxu0 0
  %1350 = vmatpush2.bf16.msra.mxu0 %v904
  %1351 = vmatprep.subr.bf16.mxu0 0
  %1352 = vmatpush2.bf16.msra.mxu0 %v901
  %1353 = vmatprep.subr.bf16.mxu0 0
  %1354 = vmatpush2.bf16.msra.mxu0 %v898
  %1355 = vmatprep.subr.bf16.mxu0 0
  %1356 = vmatpush2.bf16.msra.mxu0 %v895
  %1357 = vmatprep.mubr.bf16.mxu0 %v275
  %1358 = vmatmul.mubr.bf16.gmra.mxu0 %v274
  %v1359 = vpop.f32.mrf.mxu0
  %v1360 = vadd.f32 %v1319, %v1359
  %v1361 = vpop.f32.mrf.mxu0
  %v1362 = vpop.f32.mrf.mxu0
  %v1363 = vadd.f32 %v1322, %v1362
  %v1364 = vpop.f32.mrf.mxu0
  %1365 = vdwg.mxu0
  %1366 = vmatprep.subr.bf16.mxu0 0
  %1367 = vmatpush1.bf16.msra.mxu0 0
  %1368 = vmatprep.subr.bf16.mxu0 0
  %1369 = vmatpush1.bf16.msra.mxu0 0
  %1370 = vmatprep.subr.bf16.mxu0 0
  %1371 = vmatpush1.bf16.msra.mxu0 0
  %1372 = vmatprep.subr.bf16.mxu0 0
  %1373 = vmatpush1.bf16.msra.mxu0 0
  %1374 = vmatprep.subr.bf16.mxu0 0
  %1375 = vmatpush1.bf16.msra.mxu0 0
  %1376 = vmatprep.subr.bf16.mxu0 0
  %1377 = vmatpush1.bf16.msra.mxu0 0
  %1378 = vmatprep.subr.bf16.mxu0 0
  %1379 = vmatpush1.bf16.msra.mxu0 0
  %1380 = vmatprep.subr.bf16.mxu0 0
  %1381 = vmatpush1.bf16.msra.mxu0 %v919
  %1382 = vmatprep.subr.bf16.mxu0 0
  %1383 = vmatpush2.bf16.msra.mxu0 0
  %1384 = vmatprep.subr.bf16.mxu0 0
  %1385 = vmatpush2.bf16.msra.mxu0 0
  %1386 = vmatprep.subr.bf16.mxu0 0
  %1387 = vmatpush2.bf16.msra.mxu0 0
  %1388 = vmatprep.subr.bf16.mxu0 0
  %1389 = vmatpush2.bf16.msra.mxu0 0
  %1390 = vmatprep.subr.bf16.mxu0 0
  %1391 = vmatpush2.bf16.msra.mxu0 0
  %1392 = vmatprep.subr.bf16.mxu0 0
  %1393 = vmatpush2.bf16.msra.mxu0 0
  %1394 = vmatprep.subr.bf16.mxu0 0
  %1395 = vmatpush2.bf16.msra.mxu0 0
  %1396 = vmatprep.subr.bf16.mxu0 0
  %1397 = vmatpush2.bf16.msra.mxu0 0
  %1398 = vmatprep.mubr.bf16.mxu0 0
  %1399 = vmatmul.mubr.bf16.gmra.mxu0 %v1069
  %v1400 = vpop.f32.mrf.mxu0
  %v1401 = vadd.f32 %v1360, %v1400
  %v1402 = vpop.f32.mrf.mxu0
  %v1403 = vpop.f32.mrf.mxu0
  %v1404 = vadd.f32 %v1363, %v1403
  %v1405 = vpop.f32.mrf.mxu0
  %1406 = vdwg.mxu0
  %v1407 = vxor.u32 %v1235, 2147483648
  %v1408 = vxor.u32 %v1239, 2147483648
  %v1409 = vmul.f32 %v1407, 1.442695
  %v1410 = vpow.pop %v1409
  %v1411 = vmul.f32 %v1408, 1.442695
  %v1412 = vpow.pop %v1411
  %v1413 = vadd.f32 %v1410, 1.0
  %v1414 = vadd.f32 %v1412, 1.0
  %v1415 = vrcp.pop %v1413
  %v1416 = vmul.f32 1.0, %v1415
  %v1417 = vrcp.pop %v1414
  %v1418 = vmul.f32 1.0, %v1417
  %v1419 = vtanh.pop %v1237
  %v1420 = vtanh.pop %v1241
  %v1421 = vxor.u32 %v1401, 2147483648
  %v1422 = vxor.u32 %v1404, 2147483648
  %v1423 = vmul.f32 %v1421, 1.442695
  %v1424 = vpow.pop %v1423
  %v1425 = vmul.f32 %v1422, 1.442695
  %v1426 = vpow.pop %v1425
  %v1427 = vadd.f32 %v1424, 1.0
  %v1428 = vadd.f32 %v1426, 1.0
  %v1429 = vrcp.pop %v1427
  %v1430 = vmul.f32 1.0, %v1429
  %v1431 = vrcp.pop %v1428
  %v1432 = vmul.f32 1.0, %v1431
  %v1433 = vmul.f32 %v1416, %v1419
  %v1434 = vmul.f32 %v1418, %v1420
  %v1435 = vtanh.pop %v1433
  %v1436 = vtanh.pop %v1434
  %v1437 = vmul.f32 %v1430, %v1435
  %v1438 = vmul.f32 %v1432, %v1436
  %v1439 = vpack.c.bf16 %v1438, %v1437
  %v1440 = vld [vmem:[%s3] sm:$0xff]
  %v1441 = vld [vmem:[%s3 + $0x8] sm:$0xf]
  %v1442 = vld [vmem:[%s3 + $0xc] sm:$0xff]
  %v1443 = vld [vmem:[%s3 + $0x14] sm:$0xf]
  %v1444 = vld [vmem:[%s3 + $0x18] sm:$0xff]
  %v1445 = vld [vmem:[%s3 + $0x20] sm:$0xf]
  %v1446 = vld [vmem:[%s3 + $0x24] sm:$0xff]
  %v1447 = vld [vmem:[%s3 + $0x2c] sm:$0xf]
  %v1448 = vld [vmem:[%s3 + $0x30] sm:$0xff]
  %v1449 = vld [vmem:[%s3 + $0x38] sm:$0xf]
  %v1450 = vld [vmem:[%s3 + $0x3c] sm:$0xff]
  %v1451 = vld [vmem:[%s3 + $0x44] sm:$0xf]
  %v1452 = vld [vmem:[%s3 + $0x48] sm:$0xff]
  %v1453 = vld [vmem:[%s3 + $0x50] sm:$0xf]
  %v1454 = vld [vmem:[%s3 + $0x54] sm:$0xff]
  %v1455 = vld [vmem:[%s3 + $0x5c] sm:$0xf]
  %v1456 = vld [vmem:[%s3 + $0x60] sm:$0xff]
  %v1457 = vld [vmem:[%s3 + $0x68] sm:$0xf]
  %v1458 = vld [vmem:[%s3 + $0x6c] sm:$0xff]
  %v1459 = vld [vmem:[%s3 + $0x74] sm:$0xf]
  %v1460 = vld [vmem:[%s3 + $0x78] sm:$0xff]
  %v1461 = vld [vmem:[%s3 + $0x80] sm:$0xf]
  %v1462 = vld [vmem:[%s3 + $0x84] sm:$0xff]
  %v1463 = vld [vmem:[%s3 + $0x8c] sm:$0xf]
  %v1464 = vld [vmem:[%s3 + $0x90] sm:$0xff]
  %v1465 = vld [vmem:[%s3 + $0x98] sm:$0xf]
  %v1466 = vld [vmem:[%s3 + $0x9c] sm:$0xff]
  %v1467 = vld [vmem:[%s3 + $0xa4] sm:$0xf]
  %v1468 = vld [vmem:[%s3 + $0xa8] sm:$0xff]
  %v1469 = vld [vmem:[%s3 + $0xb0] sm:$0xf]
  %v1470 = vld [vmem:[%s3 + $0xb4] sm:$0xff]
  %v1471 = vld [vmem:[%s3 + $0xbc] sm:$0xf]
  %v1472 = vld [vmem:[%s4] sm:$0x7]
  %v1474 = vlaneseq
  %v1475 = vshrl.u32 %v1474, 7
  %v1476 = vsub.s32 0, %v1475
  %v1477 = vrot.slane %v1472, %v1476
  %v1478 = vlaneseq
  %v1479 = vshrl.u32 %v1478, 7
  %v1480 = vsub.s32 1, %v1479
  %v1481 = vrot.slane %v1472, %v1480
  %v1482 = vlaneseq
  %v1483 = vshrl.u32 %v1482, 7
  %v1484 = vsub.s32 2, %v1483
  %v1485 = vrot.slane %v1472, %v1484
  %v1521 = vunpack.c.l.b16 %v1440
  %v1522 = vunpack.c.h.b16 %v1440
  %v1523 = vunpack.c.l.b16 %v1441
  %v1524 = vunpack.c.l.b16 %v1442
  %v1525 = vunpack.c.h.b16 %v1442
  %v1526 = vunpack.c.l.b16 %v1443
  %v1527 = vunpack.c.l.b16 %v1444
  %v1528 = vunpack.c.h.b16 %v1444
  %v1529 = vunpack.c.l.b16 %v1445
  %v1530 = vunpack.c.l.b16 %v1446
  %v1531 = vunpack.c.h.b16 %v1446
  %v1532 = vunpack.c.l.b16 %v1447
  %v1533 = vunpack.c.l.b16 %v1448
  %v1534 = vunpack.c.h.b16 %v1448
  %v1535 = vunpack.c.l.b16 %v1449
  %v1536 = vunpack.c.l.b16 %v1450
  %v1537 = vunpack.c.h.b16 %v1450
  %v1538 = vunpack.c.l.b16 %v1451
  %v1539 = vunpack.c.l.b16 %v1452
  %v1540 = vunpack.c.h.b16 %v1452
  %v1541 = vunpack.c.l.b16 %v1453
  %v1542 = vunpack.c.l.b16 %v1454
  %v1543 = vunpack.c.h.b16 %v1454
  %v1544 = vunpack.c.l.b16 %v1455
  %v1545 = vunpack.c.l.b16 %v1456
  %v1546 = vunpack.c.h.b16 %v1456
  %v1547 = vunpack.c.l.b16 %v1457
  %v1548 = vunpack.c.l.b16 %v1458
  %v1549 = vunpack.c.h.b16 %v1458
  %v1550 = vunpack.c.l.b16 %v1459
  %v1551 = vunpack.c.l.b16 %v1460
  %v1552 = vunpack.c.h.b16 %v1460
  %v1553 = vunpack.c.l.b16 %v1461
  %v1554 = vunpack.c.l.b16 %v1462
  %v1555 = vunpack.c.h.b16 %v1462
  %v1556 = vunpack.c.l.b16 %v1463
  %v1557 = vunpack.c.l.b16 %v1464
  %v1558 = vunpack.c.h.b16 %v1464
  %v1559 = vunpack.c.l.b16 %v1465
  %v1560 = vunpack.c.l.b16 %v1466
  %v1561 = vunpack.c.h.b16 %v1466
  %v1562 = vunpack.c.l.b16 %v1467
  %v1563 = vunpack.c.l.b16 %v1468
  %v1564 = vunpack.c.h.b16 %v1468
  %v1565 = vunpack.c.l.b16 %v1469
  %v1566 = vunpack.c.l.b16 %v1470
  %v1567 = vunpack.c.h.b16 %v1470
  %v1568 = vunpack.c.l.b16 %v1471
  %v1569 = vpack.c.b16 %v1524, %v1521
  %v1570 = vpack.c.b16 %v1525, %v1522
  %v1571 = vpack.c.b16 %v1526, %v1523
  %v1572 = vpack.c.b16 %v1530, %v1527
  %v1573 = vpack.c.b16 %v1531, %v1528
  %v1574 = vpack.c.b16 %v1532, %v1529
  %v1575 = vpack.c.b16 %v1536, %v1533
  %v1576 = vpack.c.b16 %v1537, %v1534
  %v1577 = vpack.c.b16 %v1538, %v1535
  %v1578 = vpack.c.b16 %v1542, %v1539
  %v1579 = vpack.c.b16 %v1543, %v1540
  %v1580 = vpack.c.b16 %v1544, %v1541
  %v1581 = vpack.c.b16 %v1548, %v1545
  %v1582 = vpack.c.b16 %v1549, %v1546
  %v1583 = vpack.c.b16 %v1550, %v1547
  %v1584 = vpack.c.b16 %v1554, %v1551
  %v1585 = vpack.c.b16 %v1555, %v1552
  %v1586 = vpack.c.b16 %v1556, %v1553
  %v1587 = vpack.c.b16 %v1560, %v1557
  %v1588 = vpack.c.b16 %v1561, %v1558
  %v1589 = vpack.c.b16 %v1562, %v1559
  %v1590 = vpack.c.b16 %v1566, %v1563
  %v1591 = vpack.c.b16 %v1567, %v1564
  %v1592 = vpack.c.b16 %v1568, %v1565
  %1617 = vmatprep.subr.bf16.mxu0 %v1591
  %1618 = vmatpush1.bf16.msra.mxu0 %v1590
  %1619 = vmatprep.subr.bf16.mxu0 %v1588
  %1620 = vmatpush1.bf16.msra.mxu0 %v1587
  %1621 = vmatprep.subr.bf16.mxu0 %v1585
  %1622 = vmatpush1.bf16.msra.mxu0 %v1584
  %1623 = vmatprep.subr.bf16.mxu0 %v1582
  %1624 = vmatpush1.bf16.msra.mxu0 %v1581
  %1625 = vmatprep.subr.bf16.mxu0 %v1579
  %1626 = vmatpush1.bf16.msra.mxu0 %v1578
  %1627 = vmatprep.subr.bf16.mxu0 %v1576
  %1628 = vmatpush1.bf16.msra.mxu0 %v1575
  %1629 = vmatprep.subr.bf16.mxu0 %v1573
  %1630 = vmatpush1.bf16.msra.mxu0 %v1572
  %1631 = vmatprep.subr.bf16.mxu0 %v1570
  %1632 = vmatpush1.bf16.msra.mxu0 %v1569
  %1633 = vmatprep.subr.bf16.mxu0 0
  %1634 = vmatpush2.bf16.msra.mxu0 0
  %1635 = vmatprep.subr.bf16.mxu0 0
  %1636 = vmatpush2.bf16.msra.mxu0 0
  %1637 = vmatprep.subr.bf16.mxu0 0
  %1638 = vmatpush2.bf16.msra.mxu0 0
  %1639 = vmatprep.subr.bf16.mxu0 0
  %1640 = vmatpush2.bf16.msra.mxu0 0
  %1641 = vmatprep.subr.bf16.mxu0 0
  %1642 = vmatpush2.bf16.msra.mxu0 0
  %1643 = vmatprep.subr.bf16.mxu0 0
  %1644 = vmatpush2.bf16.msra.mxu0 0
  %1645 = vmatprep.subr.bf16.mxu0 0
  %1646 = vmatpush2.bf16.msra.mxu0 0
  %1647 = vmatprep.subr.bf16.mxu0 0
  %1648 = vmatpush2.bf16.msra.mxu0 0
  %1649 = vmatprep.mubr.bf16.mxu0 0
  %1650 = vmatmul.mubr.bf16.gmra.mxu0 %v1439
  %v1651 = vpop.f32.mrf.mxu0
  %v1652 = vadd.f32 %v1477, %v1651
  %v1653 = vpop.f32.mrf.mxu0
  %v1654 = vadd.f32 %v1481, %v1653
  %v1655 = vpop.f32.mrf.mxu0
  %v1656 = vadd.f32 %v1477, %v1655
  %v1657 = vpop.f32.mrf.mxu0
  %v1658 = vadd.f32 %v1481, %v1657
  %1659 = vdwg.mxu0
  %1660 = vmatprep.subr.bf16.mxu0 0
  %1661 = vmatpush1.bf16.msra.mxu0 %v1592
  %1662 = vmatprep.subr.bf16.mxu0 0
  %1663 = vmatpush1.bf16.msra.mxu0 %v1589
  %1664 = vmatprep.subr.bf16.mxu0 0
  %1665 = vmatpush1.bf16.msra.mxu0 %v1586
  %1666 = vmatprep.subr.bf16.mxu0 0
  %1667 = vmatpush1.bf16.msra.mxu0 %v1583
  %1668 = vmatprep.subr.bf16.mxu0 0
  %1669 = vmatpush1.bf16.msra.mxu0 %v1580
  %1670 = vmatprep.subr.bf16.mxu0 0
  %1671 = vmatpush1.bf16.msra.mxu0 %v1577
  %1672 = vmatprep.subr.bf16.mxu0 0
  %1673 = vmatpush1.bf16.msra.mxu0 %v1574
  %1674 = vmatprep.subr.bf16.mxu0 0
  %1675 = vmatpush1.bf16.msra.mxu0 %v1571
  %1676 = vmatprep.subr.bf16.mxu0 0
  %1677 = vmatpush2.bf16.msra.mxu0 0
  %1678 = vmatprep.subr.bf16.mxu0 0
  %1679 = vmatpush2.bf16.msra.mxu0 0
  %1680 = vmatprep.subr.bf16.mxu0 0
  %1681 = vmatpush2.bf16.msra.mxu0 0
  %1682 = vmatprep.subr.bf16.mxu0 0
  %1683 = vmatpush2.bf16.msra.mxu0 0
  %1684 = vmatprep.subr.bf16.mxu0 0
  %1685 = vmatpush2.bf16.msra.mxu0 0
  %1686 = vmatprep.subr.bf16.mxu0 0
  %1687 = vmatpush2.bf16.msra.mxu0 0
  %1688 = vmatprep.subr.bf16.mxu0 0
  %1689 = vmatpush2.bf16.msra.mxu0 0
  %1690 = vmatprep.subr.bf16.mxu0 0
  %1691 = vmatpush2.bf16.msra.mxu0 0
  %1692 = vmatprep.mubr.bf16.mxu0 0
  %1693 = vmatmul.mubr.bf16.gmra.mxu0 %v1439
  %v1694 = vpop.f32.mrf.mxu0
  %v1695 = vadd.f32 %v1485, %v1694
  %v1696 = vpop.f32.mrf.mxu0
  %v1697 = vpop.f32.mrf.mxu0
  %v1698 = vadd.f32 %v1485, %v1697
  %v1699 = vpop.f32.mrf.mxu0
  %1700 = vdwg.mxu0
  %v1701 = vxor.u32 %v1652, 2147483648
  %v1702 = vxor.u32 %v1656, 2147483648
  %v1703 = vmul.f32 %v1701, 1.442695
  %v1704 = vpow.pop %v1703
  %v1705 = vmul.f32 %v1702, 1.442695
  %v1706 = vpow.pop %v1705
  %v1707 = vadd.f32 %v1704, 1.0
  %v1708 = vadd.f32 %v1706, 1.0
  %v1709 = vrcp.pop %v1707
  %v1710 = vmul.f32 1.0, %v1709
  %v1711 = vrcp.pop %v1708
  %v1712 = vmul.f32 1.0, %v1711
  %v1713 = vtanh.pop %v1654
  %v1714 = vtanh.pop %v1658
  %v1715 = vxor.u32 %v1695, 2147483648
  %v1716 = vxor.u32 %v1698, 2147483648
  %v1717 = vmul.f32 %v1715, 1.442695
  %v1718 = vpow.pop %v1717
  %v1719 = vmul.f32 %v1716, 1.442695
  %v1720 = vpow.pop %v1719
  %v1721 = vadd.f32 %v1718, 1.0
  %v1722 = vadd.f32 %v1720, 1.0
  %v1723 = vrcp.pop %v1721
  %v1724 = vmul.f32 1.0, %v1723
  %v1725 = vrcp.pop %v1722
  %v1726 = vmul.f32 1.0, %v1725
  %v1727 = vmul.f32 %v1710, %v1713
  %v1728 = vmul.f32 %v1712, %v1714
  %v1729 = vtanh.pop %v1727
  %v1730 = vtanh.pop %v1728
  %v1731 = vmul.f32 %v1724, %v1729
  %v1732 = vmul.f32 %v1726, %v1730
  %v1733 = vpack.c.bf16 %v1732, %v1731
  %v1734 = vld [vmem:[%s5] sm:$0xff]
  %v1735 = vld [vmem:[%s5 + $0x8] sm:$0xff]
  %v1736 = vld [vmem:[%s5 + $0x10] sm:$0xff]
  %v1737 = vld [vmem:[%s5 + $0x18] sm:$0xff]
  %v1738 = vld [vmem:[%s5 + $0x20] sm:$0xff]
  %v1739 = vld [vmem:[%s5 + $0x28] sm:$0xff]
  %v1740 = vld [vmem:[%s5 + $0x30] sm:$0xff]
  %v1741 = vld [vmem:[%s5 + $0x38] sm:$0xff]
  %v1742 = vld [vmem:[%s5 + $0x40] sm:$0xff]
  %v1743 = vld [vmem:[%s5 + $0x48] sm:$0xf]
  %v1744 = vld [vmem:[%s5 + $0x4c] sm:$0xff]
  %v1745 = vld [vmem:[%s5 + $0x54] sm:$0xff]
  %v1746 = vld [vmem:[%s5 + $0x5c] sm:$0xff]
  %v1747 = vld [vmem:[%s5 + $0x64] sm:$0xff]
  %v1748 = vld [vmem:[%s5 + $0x6c] sm:$0xff]
  %v1749 = vld [vmem:[%s5 + $0x74] sm:$0xff]
  %v1750 = vld [vmem:[%s5 + $0x7c] sm:$0xff]
  %v1751 = vld [vmem:[%s5 + $0x84] sm:$0xff]
  %v1752 = vld [vmem:[%s5 + $0x8c] sm:$0xff]
  %v1753 = vld [vmem:[%s5 + $0x94] sm:$0xf]
  %v1754 = vld [vmem:[%s5 + $0x98] sm:$0xff]
  %v1755 = vld [vmem:[%s5 + $0xa0] sm:$0xff]
  %v1756 = vld [vmem:[%s5 + $0xa8] sm:$0xff]
  %v1757 = vld [vmem:[%s5 + $0xb0] sm:$0xff]
  %v1758 = vld [vmem:[%s5 + $0xb8] sm:$0xff]
  %v1759 = vld [vmem:[%s5 + $0xc0] sm:$0xff]
  %v1760 = vld [vmem:[%s5 + $0xc8] sm:$0xff]
  %v1761 = vld [vmem:[%s5 + $0xd0] sm:$0xff]
  %v1762 = vld [vmem:[%s5 + $0xd8] sm:$0xff]
  %v1763 = vld [vmem:[%s5 + $0xe0] sm:$0xf]
  %v1764 = vld [vmem:[%s5 + $0xe4] sm:$0xff]
  %v1765 = vld [vmem:[%s5 + $0xec] sm:$0xff]
  %v1766 = vld [vmem:[%s5 + $0xf4] sm:$0xff]
  %v1767 = vld [vmem:[%s5 + $0xfc] sm:$0xff]
  %v1768 = vld [vmem:[%s5 + $0x104] sm:$0xff]
  %v1769 = vld [vmem:[%s5 + $0x10c] sm:$0xff]
  %v1770 = vld [vmem:[%s5 + $0x114] sm:$0xff]
  %v1771 = vld [vmem:[%s5 + $0x11c] sm:$0xff]
  %v1772 = vld [vmem:[%s5 + $0x124] sm:$0xff]
  %v1773 = vld [vmem:[%s5 + $0x12c] sm:$0xf]
  %v1774 = vld [vmem:[%s5 + $0x130] sm:$0xff]
  %v1775 = vld [vmem:[%s5 + $0x138] sm:$0xff]
  %v1776 = vld [vmem:[%s5 + $0x140] sm:$0xff]
  %v1777 = vld [vmem:[%s5 + $0x148] sm:$0xff]
  %v1778 = vld [vmem:[%s5 + $0x150] sm:$0xff]
  %v1779 = vld [vmem:[%s5 + $0x158] sm:$0xff]
  %v1780 = vld [vmem:[%s5 + $0x160] sm:$0xff]
  %v1781 = vld [vmem:[%s5 + $0x168] sm:$0xff]
  %v1782 = vld [vmem:[%s5 + $0x170] sm:$0xff]
  %v1783 = vld [vmem:[%s5 + $0x178] sm:$0xf]
  %v1784 = vld [vmem:[%s5 + $0x17c] sm:$0xff]
  %v1785 = vld [vmem:[%s5 + $0x184] sm:$0xff]
  %v1786 = vld [vmem:[%s5 + $0x18c] sm:$0xff]
  %v1787 = vld [vmem:[%s5 + $0x194] sm:$0xff]
  %v1788 = vld [vmem:[%s5 + $0x19c] sm:$0xff]
  %v1789 = vld [vmem:[%s5 + $0x1a4] sm:$0xff]
  %v1790 = vld [vmem:[%s5 + $0x1ac] sm:$0xff]
  %v1791 = vld [vmem:[%s5 + $0x1b4] sm:$0xff]
  %v1792 = vld [vmem:[%s5 + $0x1bc] sm:$0xff]
  %v1793 = vld [vmem:[%s5 + $0x1c4] sm:$0xf]
  %v1794 = vld [vmem:[%s5 + $0x1c8] sm:$0xff]
  %v1795 = vld [vmem:[%s5 + $0x1d0] sm:$0xff]
  %v1796 = vld [vmem:[%s5 + $0x1d8] sm:$0xff]
  %v1797 = vld [vmem:[%s5 + $0x1e0] sm:$0xff]
  %v1798 = vld [vmem:[%s5 + $0x1e8] sm:$0xff]
  %v1799 = vld [vmem:[%s5 + $0x1f0] sm:$0xff]
  %v1800 = vld [vmem:[%s5 + $0x1f8] sm:$0xff]
  %v1801 = vld [vmem:[%s5 + $0x200] sm:$0xff]
  %v1802 = vld [vmem:[%s5 + $0x208] sm:$0xff]
  %v1803 = vld [vmem:[%s5 + $0x210] sm:$0xf]
  %v1804 = vld [vmem:[%s5 + $0x214] sm:$0xff]
  %v1805 = vld [vmem:[%s5 + $0x21c] sm:$0xff]
  %v1806 = vld [vmem:[%s5 + $0x224] sm:$0xff]
  %v1807 = vld [vmem:[%s5 + $0x22c] sm:$0xff]
  %v1808 = vld [vmem:[%s5 + $0x234] sm:$0xff]
  %v1809 = vld [vmem:[%s5 + $0x23c] sm:$0xff]
  %v1810 = vld [vmem:[%s5 + $0x244] sm:$0xff]
  %v1811 = vld [vmem:[%s5 + $0x24c] sm:$0xff]
  %v1812 = vld [vmem:[%s5 + $0x254] sm:$0xff]
  %v1813 = vld [vmem:[%s5 + $0x25c] sm:$0xf]
  %v1814 = vld [vmem:[%s5 + $0x260] sm:$0xff]
  %v1815 = vld [vmem:[%s5 + $0x268] sm:$0xff]
  %v1816 = vld [vmem:[%s5 + $0x270] sm:$0xff]
  %v1817 = vld [vmem:[%s5 + $0x278] sm:$0xff]
  %v1818 = vld [vmem:[%s5 + $0x280] sm:$0xff]
  %v1819 = vld [vmem:[%s5 + $0x288] sm:$0xff]
  %v1820 = vld [vmem:[%s5 + $0x290] sm:$0xff]
  %v1821 = vld [vmem:[%s5 + $0x298] sm:$0xff]
  %v1822 = vld [vmem:[%s5 + $0x2a0] sm:$0xff]
  %v1823 = vld [vmem:[%s5 + $0x2a8] sm:$0xf]
  %v1824 = vld [vmem:[%s5 + $0x2ac] sm:$0xff]
  %v1825 = vld [vmem:[%s5 + $0x2b4] sm:$0xff]
  %v1826 = vld [vmem:[%s5 + $0x2bc] sm:$0xff]
  %v1827 = vld [vmem:[%s5 + $0x2c4] sm:$0xff]
  %v1828 = vld [vmem:[%s5 + $0x2cc] sm:$0xff]
  %v1829 = vld [vmem:[%s5 + $0x2d4] sm:$0xff]
  %v1830 = vld [vmem:[%s5 + $0x2dc] sm:$0xff]
  %v1831 = vld [vmem:[%s5 + $0x2e4] sm:$0xff]
  %v1832 = vld [vmem:[%s5 + $0x2ec] sm:$0xff]
  %v1833 = vld [vmem:[%s5 + $0x2f4] sm:$0xf]
  %v1834 = vld [vmem:[%s5 + $0x2f8] sm:$0xff]
  %v1835 = vld [vmem:[%s5 + $0x300] sm:$0xff]
  %v1836 = vld [vmem:[%s5 + $0x308] sm:$0xff]
  %v1837 = vld [vmem:[%s5 + $0x310] sm:$0xff]
  %v1838 = vld [vmem:[%s5 + $0x318] sm:$0xff]
  %v1839 = vld [vmem:[%s5 + $0x320] sm:$0xff]
  %v1840 = vld [vmem:[%s5 + $0x328] sm:$0xff]
  %v1841 = vld [vmem:[%s5 + $0x330] sm:$0xff]
  %v1842 = vld [vmem:[%s5 + $0x338] sm:$0xff]
  %v1843 = vld [vmem:[%s5 + $0x340] sm:$0xf]
  %v1844 = vld [vmem:[%s5 + $0x344] sm:$0xff]
  %v1845 = vld [vmem:[%s5 + $0x34c] sm:$0xff]
  %v1846 = vld [vmem:[%s5 + $0x354] sm:$0xff]
  %v1847 = vld [vmem:[%s5 + $0x35c] sm:$0xff]
  %v1848 = vld [vmem:[%s5 + $0x364] sm:$0xff]
  %v1849 = vld [vmem:[%s5 + $0x36c] sm:$0xff]
  %v1850 = vld [vmem:[%s5 + $0x374] sm:$0xff]
  %v1851 = vld [vmem:[%s5 + $0x37c] sm:$0xff]
  %v1852 = vld [vmem:[%s5 + $0x384] sm:$0xff]
  %v1853 = vld [vmem:[%s5 + $0x38c] sm:$0xf]
  %v1854 = vld [vmem:[%s5 + $0x390] sm:$0xff]
  %v1855 = vld [vmem:[%s5 + $0x398] sm:$0xff]
  %v1856 = vld [vmem:[%s5 + $0x3a0] sm:$0xff]
  %v1857 = vld [vmem:[%s5 + $0x3a8] sm:$0xff]
  %v1858 = vld [vmem:[%s5 + $0x3b0] sm:$0xff]
  %v1859 = vld [vmem:[%s5 + $0x3b8] sm:$0xff]
  %v1860 = vld [vmem:[%s5 + $0x3c0] sm:$0xff]
  %v1861 = vld [vmem:[%s5 + $0x3c8] sm:$0xff]
  %v1862 = vld [vmem:[%s5 + $0x3d0] sm:$0xff]
  %v1863 = vld [vmem:[%s5 + $0x3d8] sm:$0xf]
  %v1864 = vld [vmem:[%s5 + $0x3dc] sm:$0xff]
  %v1865 = vld [vmem:[%s5 + $0x3e4] sm:$0xff]
  %v1866 = vld [vmem:[%s5 + $0x3ec] sm:$0xff]
  %v1867 = vld [vmem:[%s5 + $0x3f4] sm:$0xff]
  %v1868 = vld [vmem:[%s5 + $0x3fc] sm:$0xff]
  %v1869 = vld [vmem:[%s5 + $0x404] sm:$0xff]
  %v1870 = vld [vmem:[%s5 + $0x40c] sm:$0xff]
  %v1871 = vld [vmem:[%s5 + $0x414] sm:$0xff]
  %v1872 = vld [vmem:[%s5 + $0x41c] sm:$0xff]
  %v1873 = vld [vmem:[%s5 + $0x424] sm:$0xf]
  %v1874 = vld [vmem:[%s5 + $0x428] sm:$0xff]
  %v1875 = vld [vmem:[%s5 + $0x430] sm:$0xff]
  %v1876 = vld [vmem:[%s5 + $0x438] sm:$0xff]
  %v1877 = vld [vmem:[%s5 + $0x440] sm:$0xff]
  %v1878 = vld [vmem:[%s5 + $0x448] sm:$0xff]
  %v1879 = vld [vmem:[%s5 + $0x450] sm:$0xff]
  %v1880 = vld [vmem:[%s5 + $0x458] sm:$0xff]
  %v1881 = vld [vmem:[%s5 + $0x460] sm:$0xff]
  %v1882 = vld [vmem:[%s5 + $0x468] sm:$0xff]
  %v1883 = vld [vmem:[%s5 + $0x470] sm:$0xf]
  %v1884 = vld [vmem:[%s5 + $0x474] sm:$0xff]
  %v1885 = vld [vmem:[%s5 + $0x47c] sm:$0xff]
  %v1886 = vld [vmem:[%s5 + $0x484] sm:$0xff]
  %v1887 = vld [vmem:[%s5 + $0x48c] sm:$0xff]
  %v1888 = vld [vmem:[%s5 + $0x494] sm:$0xff]
  %v1889 = vld [vmem:[%s5 + $0x49c] sm:$0xff]
  %v1890 = vld [vmem:[%s5 + $0x4a4] sm:$0xff]
  %v1891 = vld [vmem:[%s5 + $0x4ac] sm:$0xff]
  %v1892 = vld [vmem:[%s5 + $0x4b4] sm:$0xff]
  %v1893 = vld [vmem:[%s5 + $0x4bc] sm:$0xf]
  %v1894 = vld [vmem:[%s6] sm:$0xff]
  %v1895 = vld [vmem:[%s6 + $0x8] sm:$0xff]
  %v1896 = vld [vmem:[%s6 + $0x10] sm:$0x7]
  %v1900 = vlaneseq
  %v1901 = vshrl.u32 %v1900, 7
  %v1902 = vsub.s32 0, %v1901
  %v1903 = vrot.slane %v1894, %v1902
  %v1904 = vlaneseq
  %v1905 = vshrl.u32 %v1904, 7
  %v1906 = vsub.s32 1, %v1905
  %v1907 = vrot.slane %v1894, %v1906
  %v1908 = vlaneseq
  %v1909 = vshrl.u32 %v1908, 7
  %v1910 = vsub.s32 2, %v1909
  %v1911 = vrot.slane %v1894, %v1910
  %v1912 = vlaneseq
  %v1913 = vshrl.u32 %v1912, 7
  %v1914 = vsub.s32 3, %v1913
  %v1915 = vrot.slane %v1894, %v1914
  %v1916 = vlaneseq
  %v1917 = vshrl.u32 %v1916, 7
  %v1918 = vsub.s32 4, %v1917
  %v1919 = vrot.slane %v1894, %v1918
  %v1920 = vlaneseq
  %v1921 = vshrl.u32 %v1920, 7
  %v1922 = vsub.s32 5, %v1921
  %v1923 = vrot.slane %v1894, %v1922
  %v1924 = vlaneseq
  %v1925 = vshrl.u32 %v1924, 7
  %v1926 = vsub.s32 6, %v1925
  %v1927 = vrot.slane %v1894, %v1926
  %v1928 = vlaneseq
  %v1929 = vshrl.u32 %v1928, 7
  %v1930 = vsub.s32 7, %v1929
  %v1931 = vrot.slane %v1894, %v1930
  %v1932 = vlaneseq
  %v1933 = vshrl.u32 %v1932, 7
  %v1934 = vsub.s32 0, %v1933
  %v1935 = vrot.slane %v1895, %v1934
  %v1936 = vlaneseq
  %v1937 = vshrl.u32 %v1936, 7
  %v1938 = vsub.s32 1, %v1937
  %v1939 = vrot.slane %v1895, %v1938
  %v1940 = vlaneseq
  %v1941 = vshrl.u32 %v1940, 7
  %v1942 = vsub.s32 2, %v1941
  %v1943 = vrot.slane %v1895, %v1942
  %v1944 = vlaneseq
  %v1945 = vshrl.u32 %v1944, 7
  %v1946 = vsub.s32 3, %v1945
  %v1947 = vrot.slane %v1895, %v1946
  %v1948 = vlaneseq
  %v1949 = vshrl.u32 %v1948, 7
  %v1950 = vsub.s32 4, %v1949
  %v1951 = vrot.slane %v1895, %v1950
  %v1952 = vlaneseq
  %v1953 = vshrl.u32 %v1952, 7
  %v1954 = vsub.s32 5, %v1953
  %v1955 = vrot.slane %v1895, %v1954
  %v1956 = vlaneseq
  %v1957 = vshrl.u32 %v1956, 7
  %v1958 = vsub.s32 6, %v1957
  %v1959 = vrot.slane %v1895, %v1958
  %v1960 = vlaneseq
  %v1961 = vshrl.u32 %v1960, 7
  %v1962 = vsub.s32 7, %v1961
  %v1963 = vrot.slane %v1895, %v1962
  %v1964 = vlaneseq
  %v1965 = vshrl.u32 %v1964, 7
  %v1966 = vsub.s32 0, %v1965
  %v1967 = vrot.slane %v1896, %v1966
  %v1968 = vlaneseq
  %v1969 = vshrl.u32 %v1968, 7
  %v1970 = vsub.s32 1, %v1969
  %v1971 = vrot.slane %v1896, %v1970
  %v1972 = vlaneseq
  %v1973 = vshrl.u32 %v1972, 7
  %v1974 = vsub.s32 2, %v1973
  %v1975 = vrot.slane %v1896, %v1974
  %v2155 = vunpack.c.l.b16 %v1734
  %v2156 = vunpack.c.h.b16 %v1734
  %v2157 = vunpack.c.l.b16 %v1735
  %v2158 = vunpack.c.h.b16 %v1735
  %v2159 = vunpack.c.l.b16 %v1736
  %v2160 = vunpack.c.h.b16 %v1736
  %v2161 = vunpack.c.l.b16 %v1737
  %v2162 = vunpack.c.h.b16 %v1737
  %v2163 = vunpack.c.l.b16 %v1738
  %v2164 = vunpack.c.h.b16 %v1738
  %v2165 = vunpack.c.l.b16 %v1739
  %v2166 = vunpack.c.h.b16 %v1739
  %v2167 = vunpack.c.l.b16 %v1740
  %v2168 = vunpack.c.h.b16 %v1740
  %v2169 = vunpack.c.l.b16 %v1741
  %v2170 = vunpack.c.h.b16 %v1741
  %v2171 = vunpack.c.l.b16 %v1742
  %v2172 = vunpack.c.h.b16 %v1742
  %v2173 = vunpack.c.l.b16 %v1743
  %v2174 = vunpack.c.l.b16 %v1744
  %v2175 = vunpack.c.h.b16 %v1744
  %v2176 = vunpack.c.l.b16 %v1745
  %v2177 = vunpack.c.h.b16 %v1745
  %v2178 = vunpack.c.l.b16 %v1746
  %v2179 = vunpack.c.h.b16 %v1746
  %v2180 = vunpack.c.l.b16 %v1747
  %v2181 = vunpack.c.h.b16 %v1747
  %v2182 = vunpack.c.l.b16 %v1748
  %v2183 = vunpack.c.h.b16 %v1748
  %v2184 = vunpack.c.l.b16 %v1749
  %v2185 = vunpack.c.h.b16 %v1749
  %v2186 = vunpack.c.l.b16 %v1750
  %v2187 = vunpack.c.h.b16 %v1750
  %v2188 = vunpack.c.l.b16 %v1751
  %v2189 = vunpack.c.h.b16 %v1751
  %v2190 = vunpack.c.l.b16 %v1752
  %v2191 = vunpack.c.h.b16 %v1752
  %v2192 = vunpack.c.l.b16 %v1753
  %v2193 = vunpack.c.l.b16 %v1754
  %v2194 = vunpack.c.h.b16 %v1754
  %v2195 = vunpack.c.l.b16 %v1755
  %v2196 = vunpack.c.h.b16 %v1755
  %v2197 = vunpack.c.l.b16 %v1756
  %v2198 = vunpack.c.h.b16 %v1756
  %v2199 = vunpack.c.l.b16 %v1757
  %v2200 = vunpack.c.h.b16 %v1757
  %v2201 = vunpack.c.l.b16 %v1758
  %v2202 = vunpack.c.h.b16 %v1758
  %v2203 = vunpack.c.l.b16 %v1759
  %v2204 = vunpack.c.h.b16 %v1759
  %v2205 = vunpack.c.l.b16 %v1760
  %v2206 = vunpack.c.h.b16 %v1760
  %v2207 = vunpack.c.l.b16 %v1761
  %v2208 = vunpack.c.h.b16 %v1761
  %v2209 = vunpack.c.l.b16 %v1762
  %v2210 = vunpack.c.h.b16 %v1762
  %v2211 = vunpack.c.l.b16 %v1763
  %v2212 = vunpack.c.l.b16 %v1764
  %v2213 = vunpack.c.h.b16 %v1764
  %v2214 = vunpack.c.l.b16 %v1765
  %v2215 = vunpack.c.h.b16 %v1765
  %v2216 = vunpack.c.l.b16 %v1766
  %v2217 = vunpack.c.h.b16 %v1766
  %v2218 = vunpack.c.l.b16 %v1767
  %v2219 = vunpack.c.h.b16 %v1767
  %v2220 = vunpack.c.l.b16 %v1768
  %v2221 = vunpack.c.h.b16 %v1768
  %v2222 = vunpack.c.l.b16 %v1769
  %v2223 = vunpack.c.h.b16 %v1769
  %v2224 = vunpack.c.l.b16 %v1770
  %v2225 = vunpack.c.h.b16 %v1770
  %v2226 = vunpack.c.l.b16 %v1771
  %v2227 = vunpack.c.h.b16 %v1771
  %v2228 = vunpack.c.l.b16 %v1772
  %v2229 = vunpack.c.h.b16 %v1772
  %v2230 = vunpack.c.l.b16 %v1773
  %v2231 = vunpack.c.l.b16 %v1774
  %v2232 = vunpack.c.h.b16 %v1774
  %v2233 = vunpack.c.l.b16 %v1775
  %v2234 = vunpack.c.h.b16 %v1775
  %v2235 = vunpack.c.l.b16 %v1776
  %v2236 = vunpack.c.h.b16 %v1776
  %v2237 = vunpack.c.l.b16 %v1777
  %v2238 = vunpack.c.h.b16 %v1777
  %v2239 = vunpack.c.l.b16 %v1778
  %v2240 = vunpack.c.h.b16 %v1778
  %v2241 = vunpack.c.l.b16 %v1779
  %v2242 = vunpack.c.h.b16 %v1779
  %v2243 = vunpack.c.l.b16 %v1780
  %v2244 = vunpack.c.h.b16 %v1780
  %v2245 = vunpack.c.l.b16 %v1781
  %v2246 = vunpack.c.h.b16 %v1781
  %v2247 = vunpack.c.l.b16 %v1782
  %v2248 = vunpack.c.h.b16 %v1782
  %v2249 = vunpack.c.l.b16 %v1783
  %v2250 = vunpack.c.l.b16 %v1784
  %v2251 = vunpack.c.h.b16 %v1784
  %v2252 = vunpack.c.l.b16 %v1785
  %v2253 = vunpack.c.h.b16 %v1785
  %v2254 = vunpack.c.l.b16 %v1786
  %v2255 = vunpack.c.h.b16 %v1786
  %v2256 = vunpack.c.l.b16 %v1787
  %v2257 = vunpack.c.h.b16 %v1787
  %v2258 = vunpack.c.l.b16 %v1788
  %v2259 = vunpack.c.h.b16 %v1788
  %v2260 = vunpack.c.l.b16 %v1789
  %v2261 = vunpack.c.h.b16 %v1789
  %v2262 = vunpack.c.l.b16 %v1790
  %v2263 = vunpack.c.h.b16 %v1790
  %v2264 = vunpack.c.l.b16 %v1791
  %v2265 = vunpack.c.h.b16 %v1791
  %v2266 = vunpack.c.l.b16 %v1792
  %v2267 = vunpack.c.h.b16 %v1792
  %v2268 = vunpack.c.l.b16 %v1793
  %v2269 = vunpack.c.l.b16 %v1794
  %v2270 = vunpack.c.h.b16 %v1794
  %v2271 = vunpack.c.l.b16 %v1795
  %v2272 = vunpack.c.h.b16 %v1795
  %v2273 = vunpack.c.l.b16 %v1796
  %v2274 = vunpack.c.h.b16 %v1796
  %v2275 = vunpack.c.l.b16 %v1797
  %v2276 = vunpack.c.h.b16 %v1797
  %v2277 = vunpack.c.l.b16 %v1798
  %v2278 = vunpack.c.h.b16 %v1798
  %v2279 = vunpack.c.l.b16 %v1799
  %v2280 = vunpack.c.h.b16 %v1799
  %v2281 = vunpack.c.l.b16 %v1800
  %v2282 = vunpack.c.h.b16 %v1800
  %v2283 = vunpack.c.l.b16 %v1801
  %v2284 = vunpack.c.h.b16 %v1801
  %v2285 = vunpack.c.l.b16 %v1802
  %v2286 = vunpack.c.h.b16 %v1802
  %v2287 = vunpack.c.l.b16 %v1803
  %v2288 = vunpack.c.l.b16 %v1804
  %v2289 = vunpack.c.h.b16 %v1804
  %v2290 = vunpack.c.l.b16 %v1805
  %v2291 = vunpack.c.h.b16 %v1805
  %v2292 = vunpack.c.l.b16 %v1806
  %v2293 = vunpack.c.h.b16 %v1806
  %v2294 = vunpack.c.l.b16 %v1807
  %v2295 = vunpack.c.h.b16 %v1807
  %v2296 = vunpack.c.l.b16 %v1808
  %v2297 = vunpack.c.h.b16 %v1808
  %v2298 = vunpack.c.l.b16 %v1809
  %v2299 = vunpack.c.h.b16 %v1809
  %v2300 = vunpack.c.l.b16 %v1810
  %v2301 = vunpack.c.h.b16 %v1810
  %v2302 = vunpack.c.l.b16 %v1811
  %v2303 = vunpack.c.h.b16 %v1811
  %v2304 = vunpack.c.l.b16 %v1812
  %v2305 = vunpack.c.h.b16 %v1812
  %v2306 = vunpack.c.l.b16 %v1813
  %v2307 = vunpack.c.l.b16 %v1814
  %v2308 = vunpack.c.h.b16 %v1814
  %v2309 = vunpack.c.l.b16 %v1815
  %v2310 = vunpack.c.h.b16 %v1815
  %v2311 = vunpack.c.l.b16 %v1816
  %v2312 = vunpack.c.h.b16 %v1816
  %v2313 = vunpack.c.l.b16 %v1817
  %v2314 = vunpack.c.h.b16 %v1817
  %v2315 = vunpack.c.l.b16 %v1818
  %v2316 = vunpack.c.h.b16 %v1818
  %v2317 = vunpack.c.l.b16 %v1819
  %v2318 = vunpack.c.h.b16 %v1819
  %v2319 = vunpack.c.l.b16 %v1820
  %v2320 = vunpack.c.h.b16 %v1820
  %v2321 = vunpack.c.l.b16 %v1821
  %v2322 = vunpack.c.h.b16 %v1821
  %v2323 = vunpack.c.l.b16 %v1822
  %v2324 = vunpack.c.h.b16 %v1822
  %v2325 = vunpack.c.l.b16 %v1823
  %v2326 = vunpack.c.l.b16 %v1824
  %v2327 = vunpack.c.h.b16 %v1824
  %v2328 = vunpack.c.l.b16 %v1825
  %v2329 = vunpack.c.h.b16 %v1825
  %v2330 = vunpack.c.l.b16 %v1826
  %v2331 = vunpack.c.h.b16 %v1826
  %v2332 = vunpack.c.l.b16 %v1827
  %v2333 = vunpack.c.h.b16 %v1827
  %v2334 = vunpack.c.l.b16 %v1828
  %v2335 = vunpack.c.h.b16 %v1828
  %v2336 = vunpack.c.l.b16 %v1829
  %v2337 = vunpack.c.h.b16 %v1829
  %v2338 = vunpack.c.l.b16 %v1830
  %v2339 = vunpack.c.h.b16 %v1830
  %v2340 = vunpack.c.l.b16 %v1831
  %v2341 = vunpack.c.h.b16 %v1831
  %v2342 = vunpack.c.l.b16 %v1832
  %v2343 = vunpack.c.h.b16 %v1832
  %v2344 = vunpack.c.l.b16 %v1833
  %v2345 = vunpack.c.l.b16 %v1834
  %v2346 = vunpack.c.h.b16 %v1834
  %v2347 = vunpack.c.l.b16 %v1835
  %v2348 = vunpack.c.h.b16 %v1835
  %v2349 = vunpack.c.l.b16 %v1836
  %v2350 = vunpack.c.h.b16 %v1836
  %v2351 = vunpack.c.l.b16 %v1837
  %v2352 = vunpack.c.h.b16 %v1837
  %v2353 = vunpack.c.l.b16 %v1838
  %v2354 = vunpack.c.h.b16 %v1838
  %v2355 = vunpack.c.l.b16 %v1839
  %v2356 = vunpack.c.h.b16 %v1839
  %v2357 = vunpack.c.l.b16 %v1840
  %v2358 = vunpack.c.h.b16 %v1840
  %v2359 = vunpack.c.l.b16 %v1841
  %v2360 = vunpack.c.h.b16 %v1841
  %v2361 = vunpack.c.l.b16 %v1842
  %v2362 = vunpack.c.h.b16 %v1842
  %v2363 = vunpack.c.l.b16 %v1843
  %v2364 = vunpack.c.l.b16 %v1844
  %v2365 = vunpack.c.h.b16 %v1844
  %v2366 = vunpack.c.l.b16 %v1845
  %v2367 = vunpack.c.h.b16 %v1845
  %v2368 = vunpack.c.l.b16 %v1846
  %v2369 = vunpack.c.h.b16 %v1846
  %v2370 = vunpack.c.l.b16 %v1847
  %v2371 = vunpack.c.h.b16 %v1847
  %v2372 = vunpack.c.l.b16 %v1848
  %v2373 = vunpack.c.h.b16 %v1848
  %v2374 = vunpack.c.l.b16 %v1849
  %v2375 = vunpack.c.h.b16 %v1849
  %v2376 = vunpack.c.l.b16 %v1850
  %v2377 = vunpack.c.h.b16 %v1850
  %v2378 = vunpack.c.l.b16 %v1851
  %v2379 = vunpack.c.h.b16 %v1851
  %v2380 = vunpack.c.l.b16 %v1852
  %v2381 = vunpack.c.h.b16 %v1852
  %v2382 = vunpack.c.l.b16 %v1853
  %v2383 = vunpack.c.l.b16 %v1854
  %v2384 = vunpack.c.h.b16 %v1854
  %v2385 = vunpack.c.l.b16 %v1855
  %v2386 = vunpack.c.h.b16 %v1855
  %v2387 = vunpack.c.l.b16 %v1856
  %v2388 = vunpack.c.h.b16 %v1856
  %v2389 = vunpack.c.l.b16 %v1857
  %v2390 = vunpack.c.h.b16 %v1857
  %v2391 = vunpack.c.l.b16 %v1858
  %v2392 = vunpack.c.h.b16 %v1858
  %v2393 = vunpack.c.l.b16 %v1859
  %v2394 = vunpack.c.h.b16 %v1859
  %v2395 = vunpack.c.l.b16 %v1860
  %v2396 = vunpack.c.h.b16 %v1860
  %v2397 = vunpack.c.l.b16 %v1861
  %v2398 = vunpack.c.h.b16 %v1861
  %v2399 = vunpack.c.l.b16 %v1862
  %v2400 = vunpack.c.h.b16 %v1862
  %v2401 = vunpack.c.l.b16 %v1863
  %v2402 = vunpack.c.l.b16 %v1864
  %v2403 = vunpack.c.h.b16 %v1864
  %v2404 = vunpack.c.l.b16 %v1865
  %v2405 = vunpack.c.h.b16 %v1865
  %v2406 = vunpack.c.l.b16 %v1866
  %v2407 = vunpack.c.h.b16 %v1866
  %v2408 = vunpack.c.l.b16 %v1867
  %v2409 = vunpack.c.h.b16 %v1867
  %v2410 = vunpack.c.l.b16 %v1868
  %v2411 = vunpack.c.h.b16 %v1868
  %v2412 = vunpack.c.l.b16 %v1869
  %v2413 = vunpack.c.h.b16 %v1869
  %v2414 = vunpack.c.l.b16 %v1870
  %v2415 = vunpack.c.h.b16 %v1870
  %v2416 = vunpack.c.l.b16 %v1871
  %v2417 = vunpack.c.h.b16 %v1871
  %v2418 = vunpack.c.l.b16 %v1872
  %v2419 = vunpack.c.h.b16 %v1872
  %v2420 = vunpack.c.l.b16 %v1873
  %v2421 = vunpack.c.l.b16 %v1874
  %v2422 = vunpack.c.h.b16 %v1874
  %v2423 = vunpack.c.l.b16 %v1875
  %v2424 = vunpack.c.h.b16 %v1875
  %v2425 = vunpack.c.l.b16 %v1876
  %v2426 = vunpack.c.h.b16 %v1876
  %v2427 = vunpack.c.l.b16 %v1877
  %v2428 = vunpack.c.h.b16 %v1877
  %v2429 = vunpack.c.l.b16 %v1878
  %v2430 = vunpack.c.h.b16 %v1878
  %v2431 = vunpack.c.l.b16 %v1879
  %v2432 = vunpack.c.h.b16 %v1879
  %v2433 = vunpack.c.l.b16 %v1880
  %v2434 = vunpack.c.h.b16 %v1880
  %v2435 = vunpack.c.l.b16 %v1881
  %v2436 = vunpack.c.h.b16 %v1881
  %v2437 = vunpack.c.l.b16 %v1882
  %v2438 = vunpack.c.h.b16 %v1882
  %v2439 = vunpack.c.l.b16 %v1883
  %v2440 = vunpack.c.l.b16 %v1884
  %v2441 = vunpack.c.h.b16 %v1884
  %v2442 = vunpack.c.l.b16 %v1885
  %v2443 = vunpack.c.h.b16 %v1885
  %v2444 = vunpack.c.l.b16 %v1886
  %v2445 = vunpack.c.h.b16 %v1886
  %v2446 = vunpack.c.l.b16 %v1887
  %v2447 = vunpack.c.h.b16 %v1887
  %v2448 = vunpack.c.l.b16 %v1888
  %v2449 = vunpack.c.h.b16 %v1888
  %v2450 = vunpack.c.l.b16 %v1889
  %v2451 = vunpack.c.h.b16 %v1889
  %v2452 = vunpack.c.l.b16 %v1890
  %v2453 = vunpack.c.h.b16 %v1890
  %v2454 = vunpack.c.l.b16 %v1891
  %v2455 = vunpack.c.h.b16 %v1891
  %v2456 = vunpack.c.l.b16 %v1892
  %v2457 = vunpack.c.h.b16 %v1892
  %v2458 = vunpack.c.l.b16 %v1893
  %v2459 = vpack.c.b16 %v2174, %v2155
  %v2460 = vpack.c.b16 %v2175, %v2156
  %v2461 = vpack.c.b16 %v2176, %v2157
  %v2462 = vpack.c.b16 %v2177, %v2158
  %v2463 = vpack.c.b16 %v2178, %v2159
  %v2464 = vpack.c.b16 %v2179, %v2160
  %v2465 = vpack.c.b16 %v2180, %v2161
  %v2466 = vpack.c.b16 %v2181, %v2162
  %v2467 = vpack.c.b16 %v2182, %v2163
  %v2468 = vpack.c.b16 %v2183, %v2164
  %v2469 = vpack.c.b16 %v2184, %v2165
  %v2470 = vpack.c.b16 %v2185, %v2166
  %v2471 = vpack.c.b16 %v2186, %v2167
  %v2472 = vpack.c.b16 %v2187, %v2168
  %v2473 = vpack.c.b16 %v2188, %v2169
  %v2474 = vpack.c.b16 %v2189, %v2170
  %v2475 = vpack.c.b16 %v2190, %v2171
  %v2476 = vpack.c.b16 %v2191, %v2172
  %v2477 = vpack.c.b16 %v2192, %v2173
  %v2478 = vpack.c.b16 %v2212, %v2193
  %v2479 = vpack.c.b16 %v2213, %v2194
  %v2480 = vpack.c.b16 %v2214, %v2195
  %v2481 = vpack.c.b16 %v2215, %v2196
  %v2482 = vpack.c.b16 %v2216, %v2197
  %v2483 = vpack.c.b16 %v2217, %v2198
  %v2484 = vpack.c.b16 %v2218, %v2199
  %v2485 = vpack.c.b16 %v2219, %v2200
  %v2486 = vpack.c.b16 %v2220, %v2201
  %v2487 = vpack.c.b16 %v2221, %v2202
  %v2488 = vpack.c.b16 %v2222, %v2203
  %v2489 = vpack.c.b16 %v2223, %v2204
  %v2490 = vpack.c.b16 %v2224, %v2205
  %v2491 = vpack.c.b16 %v2225, %v2206
  %v2492 = vpack.c.b16 %v2226, %v2207
  %v2493 = vpack.c.b16 %v2227, %v2208
  %v2494 = vpack.c.b16 %v2228, %v2209
  %v2495 = vpack.c.b16 %v2229, %v2210
  %v2496 = vpack.c.b16 %v2230, %v2211
  %v2497 = vpack.c.b16 %v2250, %v2231
  %v2498 = vpack.c.b16 %v2251, %v2232
  %v2499 = vpack.c.b16 %v2252, %v2233
  %v2500 = vpack.c.b16 %v2253, %v2234
  %v2501 = vpack.c.b16 %v2254, %v2235
  %v2502 = vpack.c.b16 %v2255, %v2236
  %v2503 = vpack.c.b16 %v2256, %v2237
  %v2504 = vpack.c.b16 %v2257, %v2238
  %v2505 = vpack.c.b16 %v2258, %v2239
  %v2506 = vpack.c.b16 %v2259, %v2240
  %v2507 = vpack.c.b16 %v2260, %v2241
  %v2508 = vpack.c.b16 %v2261, %v2242
  %v2509 = vpack.c.b16 %v2262, %v2243
  %v2510 = vpack.c.b16 %v2263, %v2244
  %v2511 = vpack.c.b16 %v2264, %v2245
  %v2512 = vpack.c.b16 %v2265, %v2246
  %v2513 = vpack.c.b16 %v2266, %v2247
  %v2514 = vpack.c.b16 %v2267, %v2248
  %v2515 = vpack.c.b16 %v2268, %v2249
  %v2516 = vpack.c.b16 %v2288, %v2269
  %v2517 = vpack.c.b16 %v2289, %v2270
  %v2518 = vpack.c.b16 %v2290, %v2271
  %v2519 = vpack.c.b16 %v2291, %v2272
  %v2520 = vpack.c.b16 %v2292, %v2273
  %v2521 = vpack.c.b16 %v2293, %v2274
  %v2522 = vpack.c.b16 %v2294, %v2275
  %v2523 = vpack.c.b16 %v2295, %v2276
  %v2524 = vpack.c.b16 %v2296, %v2277
  %v2525 = vpack.c.b16 %v2297, %v2278
  %v2526 = vpack.c.b16 %v2298, %v2279
  %v2527 = vpack.c.b16 %v2299, %v2280
  %v2528 = vpack.c.b16 %v2300, %v2281
  %v2529 = vpack.c.b16 %v2301, %v2282
  %v2530 = vpack.c.b16 %v2302, %v2283
  %v2531 = vpack.c.b16 %v2303, %v2284
  %v2532 = vpack.c.b16 %v2304, %v2285
  %v2533 = vpack.c.b16 %v2305, %v2286
  %v2534 = vpack.c.b16 %v2306, %v2287
  %v2535 = vpack.c.b16 %v2326, %v2307
  %v2536 = vpack.c.b16 %v2327, %v2308
  %v2537 = vpack.c.b16 %v2328, %v2309
  %v2538 = vpack.c.b16 %v2329, %v2310
  %v2539 = vpack.c.b16 %v2330, %v2311
  %v2540 = vpack.c.b16 %v2331, %v2312
  %v2541 = vpack.c.b16 %v2332, %v2313
  %v2542 = vpack.c.b16 %v2333, %v2314
  %v2543 = vpack.c.b16 %v2334, %v2315
  %v2544 = vpack.c.b16 %v2335, %v2316
  %v2545 = vpack.c.b16 %v2336, %v2317
  %v2546 = vpack.c.b16 %v2337, %v2318
  %v2547 = vpack.c.b16 %v2338, %v2319
  %v2548 = vpack.c.b16 %v2339, %v2320
  %v2549 = vpack.c.b16 %v2340, %v2321
  %v2550 = vpack.c.b16 %v2341, %v2322
  %v2551 = vpack.c.b16 %v2342, %v2323
  %v2552 = vpack.c.b16 %v2343, %v2324
  %v2553 = vpack.c.b16 %v2344, %v2325
  %v2554 = vpack.c.b16 %v2364, %v2345
  %v2555 = vpack.c.b16 %v2365, %v2346
  %v2556 = vpack.c.b16 %v2366, %v2347
  %v2557 = vpack.c.b16 %v2367, %v2348
  %v2558 = vpack.c.b16 %v2368, %v2349
  %v2559 = vpack.c.b16 %v2369, %v2350
  %v2560 = vpack.c.b16 %v2370, %v2351
  %v2561 = vpack.c.b16 %v2371, %v2352
  %v2562 = vpack.c.b16 %v2372, %v2353
  %v2563 = vpack.c.b16 %v2373, %v2354
  %v2564 = vpack.c.b16 %v2374, %v2355
  %v2565 = vpack.c.b16 %v2375, %v2356
  %v2566 = vpack.c.b16 %v2376, %v2357
  %v2567 = vpack.c.b16 %v2377, %v2358
  %v2568 = vpack.c.b16 %v2378, %v2359
  %v2569 = vpack.c.b16 %v2379, %v2360
  %v2570 = vpack.c.b16 %v2380, %v2361
  %v2571 = vpack.c.b16 %v2381, %v2362
  %v2572 = vpack.c.b16 %v2382, %v2363
  %v2573 = vpack.c.b16 %v2402, %v2383
  %v2574 = vpack.c.b16 %v2403, %v2384
  %v2575 = vpack.c.b16 %v2404, %v2385
  %v2576 = vpack.c.b16 %v2405, %v2386
  %v2577 = vpack.c.b16 %v2406, %v2387
  %v2578 = vpack.c.b16 %v2407, %v2388
  %v2579 = vpack.c.b16 %v2408, %v2389
  %v2580 = vpack.c.b16 %v2409, %v2390
  %v2581 = vpack.c.b16 %v2410, %v2391
  %v2582 = vpack.c.b16 %v2411, %v2392
  %v2583 = vpack.c.b16 %v2412, %v2393
  %v2584 = vpack.c.b16 %v2413, %v2394
  %v2585 = vpack.c.b16 %v2414, %v2395
  %v2586 = vpack.c.b16 %v2415, %v2396
  %v2587 = vpack.c.b16 %v2416, %v2397
  %v2588 = vpack.c.b16 %v2417, %v2398
  %v2589 = vpack.c.b16 %v2418, %v2399
  %v2590 = vpack.c.b16 %v2419, %v2400
  %v2591 = vpack.c.b16 %v2420, %v2401
  %v2592 = vpack.c.b16 %v2440, %v2421
  %v2593 = vpack.c.b16 %v2441, %v2422
  %v2594 = vpack.c.b16 %v2442, %v2423
  %v2595 = vpack.c.b16 %v2443, %v2424
  %v2596 = vpack.c.b16 %v2444, %v2425
  %v2597 = vpack.c.b16 %v2445, %v2426
  %v2598 = vpack.c.b16 %v2446, %v2427
  %v2599 = vpack.c.b16 %v2447, %v2428
  %v2600 = vpack.c.b16 %v2448, %v2429
  %v2601 = vpack.c.b16 %v2449, %v2430
  %v2602 = vpack.c.b16 %v2450, %v2431
  %v2603 = vpack.c.b16 %v2451, %v2432
  %v2604 = vpack.c.b16 %v2452, %v2433
  %v2605 = vpack.c.b16 %v2453, %v2434
  %v2606 = vpack.c.b16 %v2454, %v2435
  %v2607 = vpack.c.b16 %v2455, %v2436
  %v2608 = vpack.c.b16 %v2456, %v2437
  %v2609 = vpack.c.b16 %v2457, %v2438
  %v2610 = vpack.c.b16 %v2458, %v2439
  %2763 = vmatprep.subr.bf16.mxu0 %v2593
  %2764 = vmatpush1.bf16.msra.mxu0 %v2592
  %2765 = vmatprep.subr.bf16.mxu0 %v2574
  %2766 = vmatpush1.bf16.msra.mxu0 %v2573
  %2767 = vmatprep.subr.bf16.mxu0 %v2555
  %2768 = vmatpush1.bf16.msra.mxu0 %v2554
  %2769 = vmatprep.subr.bf16.mxu0 %v2536
  %2770 = vmatpush1.bf16.msra.mxu0 %v2535
  %2771 = vmatprep.subr.bf16.mxu0 %v2517
  %2772 = vmatpush1.bf16.msra.mxu0 %v2516
  %2773 = vmatprep.subr.bf16.mxu0 %v2498
  %2774 = vmatpush1.bf16.msra.mxu0 %v2497
  %2775 = vmatprep.subr.bf16.mxu0 %v2479
  %2776 = vmatpush1.bf16.msra.mxu0 %v2478
  %2777 = vmatprep.subr.bf16.mxu0 %v2460
  %2778 = vmatpush1.bf16.msra.mxu0 %v2459
  %2779 = vmatprep.subr.bf16.mxu0 0
  %2780 = vmatpush2.bf16.msra.mxu0 0
  %2781 = vmatprep.subr.bf16.mxu0 0
  %2782 = vmatpush2.bf16.msra.mxu0 0
  %2783 = vmatprep.subr.bf16.mxu0 0
  %2784 = vmatpush2.bf16.msra.mxu0 0
  %2785 = vmatprep.subr.bf16.mxu0 0
  %2786 = vmatpush2.bf16.msra.mxu0 0
  %2787 = vmatprep.subr.bf16.mxu0 0
  %2788 = vmatpush2.bf16.msra.mxu0 0
  %2789 = vmatprep.subr.bf16.mxu0 0
  %2790 = vmatpush2.bf16.msra.mxu0 0
  %2791 = vmatprep.subr.bf16.mxu0 0
  %2792 = vmatpush2.bf16.msra.mxu0 0
  %2793 = vmatprep.subr.bf16.mxu0 0
  %2794 = vmatpush2.bf16.msra.mxu0 0
  %2795 = vmatprep.mubr.bf16.mxu0 0
  %2796 = vmatmul.mubr.bf16.gmra.mxu0 %v1733
  %v2797 = vpop.f32.mrf.mxu0
  %v2798 = vadd.f32 %v1903, %v2797
  %v2799 = vpop.f32.mrf.mxu0
  %v2800 = vadd.f32 %v1907, %v2799
  %v2801 = vpop.f32.mrf.mxu0
  %v2802 = vadd.f32 %v1903, %v2801
  %v2803 = vpop.f32.mrf.mxu0
  %v2804 = vadd.f32 %v1907, %v2803
  %2805 = vdwg.mxu0
  %2806 = vmatprep.subr.bf16.mxu0 %v2595
  %2807 = vmatpush1.bf16.msra.mxu0 %v2594
  %2808 = vmatprep.subr.bf16.mxu0 %v2576
  %2809 = vmatpush1.bf16.msra.mxu0 %v2575
  %2810 = vmatprep.subr.bf16.mxu0 %v2557
  %2811 = vmatpush1.bf16.msra.mxu0 %v2556
  %2812 = vmatprep.subr.bf16.mxu0 %v2538
  %2813 = vmatpush1.bf16.msra.mxu0 %v2537
  %2814 = vmatprep.subr.bf16.mxu0 %v2519
  %2815 = vmatpush1.bf16.msra.mxu0 %v2518
  %2816 = vmatprep.subr.bf16.mxu0 %v2500
  %2817 = vmatpush1.bf16.msra.mxu0 %v2499
  %2818 = vmatprep.subr.bf16.mxu0 %v2481
  %2819 = vmatpush1.bf16.msra.mxu0 %v2480
  %2820 = vmatprep.subr.bf16.mxu0 %v2462
  %2821 = vmatpush1.bf16.msra.mxu0 %v2461
  %2822 = vmatprep.subr.bf16.mxu0 0
  %2823 = vmatpush2.bf16.msra.mxu0 0
  %2824 = vmatprep.subr.bf16.mxu0 0
  %2825 = vmatpush2.bf16.msra.mxu0 0
  %2826 = vmatprep.subr.bf16.mxu0 0
  %2827 = vmatpush2.bf16.msra.mxu0 0
  %2828 = vmatprep.subr.bf16.mxu0 0
  %2829 = vmatpush2.bf16.msra.mxu0 0
  %2830 = vmatprep.subr.bf16.mxu0 0
  %2831 = vmatpush2.bf16.msra.mxu0 0
  %2832 = vmatprep.subr.bf16.mxu0 0
  %2833 = vmatpush2.bf16.msra.mxu0 0
  %2834 = vmatprep.subr.bf16.mxu0 0
  %2835 = vmatpush2.bf16.msra.mxu0 0
  %2836 = vmatprep.subr.bf16.mxu0 0
  %2837 = vmatpush2.bf16.msra.mxu0 0
  %2838 = vmatprep.mubr.bf16.mxu0 0
  %2839 = vmatmul.mubr.bf16.gmra.mxu0 %v1733
  %v2840 = vpop.f32.mrf.mxu0
  %v2841 = vadd.f32 %v1911, %v2840
  %v2842 = vpop.f32.mrf.mxu0
  %v2843 = vadd.f32 %v1915, %v2842
  %v2844 = vpop.f32.mrf.mxu0
  %v2845 = vadd.f32 %v1911, %v2844
  %v2846 = vpop.f32.mrf.mxu0
  %v2847 = vadd.f32 %v1915, %v2846
  %2848 = vdwg.mxu0
  %2849 = vmatprep.subr.bf16.mxu0 %v2597
  %2850 = vmatpush1.bf16.msra.mxu0 %v2596
  %2851 = vmatprep.subr.bf16.mxu0 %v2578
  %2852 = vmatpush1.bf16.msra.mxu0 %v2577
  %2853 = vmatprep.subr.bf16.mxu0 %v2559
  %2854 = vmatpush1.bf16.msra.mxu0 %v2558
  %2855 = vmatprep.subr.bf16.mxu0 %v2540
  %2856 = vmatpush1.bf16.msra.mxu0 %v2539
  %2857 = vmatprep.subr.bf16.mxu0 %v2521
  %2858 = vmatpush1.bf16.msra.mxu0 %v2520
  %2859 = vmatprep.subr.bf16.mxu0 %v2502
  %2860 = vmatpush1.bf16.msra.mxu0 %v2501
  %2861 = vmatprep.subr.bf16.mxu0 %v2483
  %2862 = vmatpush1.bf16.msra.mxu0 %v2482
  %2863 = vmatprep.subr.bf16.mxu0 %v2464
  %2864 = vmatpush1.bf16.msra.mxu0 %v2463
  %2865 = vmatprep.subr.bf16.mxu0 0
  %2866 = vmatpush2.bf16.msra.mxu0 0
  %2867 = vmatprep.subr.bf16.mxu0 0
  %2868 = vmatpush2.bf16.msra.mxu0 0
  %2869 = vmatprep.subr.bf16.mxu0 0
  %2870 = vmatpush2.bf16.msra.mxu0 0
  %2871 = vmatprep.subr.bf16.mxu0 0
  %2872 = vmatpush2.bf16.msra.mxu0 0
  %2873 = vmatprep.subr.bf16.mxu0 0
  %2874 = vmatpush2.bf16.msra.mxu0 0
  %2875 = vmatprep.subr.bf16.mxu0 0
  %2876 = vmatpush2.bf16.msra.mxu0 0
  %2877 = vmatprep.subr.bf16.mxu0 0
  %2878 = vmatpush2.bf16.msra.mxu0 0
  %2879 = vmatprep.subr.bf16.mxu0 0
  %2880 = vmatpush2.bf16.msra.mxu0 0
  %2881 = vmatprep.mubr.bf16.mxu0 0
  %2882 = vmatmul.mubr.bf16.gmra.mxu0 %v1733
  %v2883 = vpop.f32.mrf.mxu0
  %v2884 = vadd.f32 %v1919, %v2883
  %v2885 = vpop.f32.mrf.mxu0
  %v2886 = vadd.f32 %v1923, %v2885
  %v2887 = vpop.f32.mrf.mxu0
  %v2888 = vadd.f32 %v1919, %v2887
  %v2889 = vpop.f32.mrf.mxu0
  %v2890 = vadd.f32 %v1923, %v2889
  %2891 = vdwg.mxu0
  %2892 = vmatprep.subr.bf16.mxu0 %v2599
  %2893 = vmatpush1.bf16.msra.mxu0 %v2598
  %2894 = vmatprep.subr.bf16.mxu0 %v2580
  %2895 = vmatpush1.bf16.msra.mxu0 %v2579
  %2896 = vmatprep.subr.bf16.mxu0 %v2561
  %2897 = vmatpush1.bf16.msra.mxu0 %v2560
  %2898 = vmatprep.subr.bf16.mxu0 %v2542
  %2899 = vmatpush1.bf16.msra.mxu0 %v2541
  %2900 = vmatprep.subr.bf16.mxu0 %v2523
  %2901 = vmatpush1.bf16.msra.mxu0 %v2522
  %2902 = vmatprep.subr.bf16.mxu0 %v2504
  %2903 = vmatpush1.bf16.msra.mxu0 %v2503
  %2904 = vmatprep.subr.bf16.mxu0 %v2485
  %2905 = vmatpush1.bf16.msra.mxu0 %v2484
  %2906 = vmatprep.subr.bf16.mxu0 %v2466
  %2907 = vmatpush1.bf16.msra.mxu0 %v2465
  %2908 = vmatprep.subr.bf16.mxu0 0
  %2909 = vmatpush2.bf16.msra.mxu0 0
  %2910 = vmatprep.subr.bf16.mxu0 0
  %2911 = vmatpush2.bf16.msra.mxu0 0
  %2912 = vmatprep.subr.bf16.mxu0 0
  %2913 = vmatpush2.bf16.msra.mxu0 0
  %2914 = vmatprep.subr.bf16.mxu0 0
  %2915 = vmatpush2.bf16.msra.mxu0 0
  %2916 = vmatprep.subr.bf16.mxu0 0
  %2917 = vmatpush2.bf16.msra.mxu0 0
  %2918 = vmatprep.subr.bf16.mxu0 0
  %2919 = vmatpush2.bf16.msra.mxu0 0
  %2920 = vmatprep.subr.bf16.mxu0 0
  %2921 = vmatpush2.bf16.msra.mxu0 0
  %2922 = vmatprep.subr.bf16.mxu0 0
  %2923 = vmatpush2.bf16.msra.mxu0 0
  %2924 = vmatprep.mubr.bf16.mxu0 0
  %2925 = vmatmul.mubr.bf16.gmra.mxu0 %v1733
  %v2926 = vpop.f32.mrf.mxu0
  %v2927 = vadd.f32 %v1927, %v2926
  %v2928 = vpop.f32.mrf.mxu0
  %v2929 = vadd.f32 %v1931, %v2928
  %v2930 = vpop.f32.mrf.mxu0
  %v2931 = vadd.f32 %v1927, %v2930
  %v2932 = vpop.f32.mrf.mxu0
  %v2933 = vadd.f32 %v1931, %v2932
  %2934 = vdwg.mxu0
  %2935 = vmatprep.subr.bf16.mxu0 %v2601
  %2936 = vmatpush1.bf16.msra.mxu0 %v2600
  %2937 = vmatprep.subr.bf16.mxu0 %v2582
  %2938 = vmatpush1.bf16.msra.mxu0 %v2581
  %2939 = vmatprep.subr.bf16.mxu0 %v2563
  %2940 = vmatpush1.bf16.msra.mxu0 %v2562
  %2941 = vmatprep.subr.bf16.mxu0 %v2544
  %2942 = vmatpush1.bf16.msra.mxu0 %v2543
  %2943 = vmatprep.subr.bf16.mxu0 %v2525
  %2944 = vmatpush1.bf16.msra.mxu0 %v2524
  %2945 = vmatprep.subr.bf16.mxu0 %v2506
  %2946 = vmatpush1.bf16.msra.mxu0 %v2505
  %2947 = vmatprep.subr.bf16.mxu0 %v2487
  %2948 = vmatpush1.bf16.msra.mxu0 %v2486
  %2949 = vmatprep.subr.bf16.mxu0 %v2468
  %2950 = vmatpush1.bf16.msra.mxu0 %v2467
  %2951 = vmatprep.subr.bf16.mxu0 0
  %2952 = vmatpush2.bf16.msra.mxu0 0
  %2953 = vmatprep.subr.bf16.mxu0 0
  %2954 = vmatpush2.bf16.msra.mxu0 0
  %2955 = vmatprep.subr.bf16.mxu0 0
  %2956 = vmatpush2.bf16.msra.mxu0 0
  %2957 = vmatprep.subr.bf16.mxu0 0
  %2958 = vmatpush2.bf16.msra.mxu0 0
  %2959 = vmatprep.subr.bf16.mxu0 0
  %2960 = vmatpush2.bf16.msra.mxu0 0
  %2961 = vmatprep.subr.bf16.mxu0 0
  %2962 = vmatpush2.bf16.msra.mxu0 0
  %2963 = vmatprep.subr.bf16.mxu0 0
  %2964 = vmatpush2.bf16.msra.mxu0 0
  %2965 = vmatprep.subr.bf16.mxu0 0
  %2966 = vmatpush2.bf16.msra.mxu0 0
  %2967 = vmatprep.mubr.bf16.mxu0 0
  %2968 = vmatmul.mubr.bf16.gmra.mxu0 %v1733
  %v2969 = vpop.f32.mrf.mxu0
  %v2970 = vadd.f32 %v1935, %v2969
  %v2971 = vpop.f32.mrf.mxu0
  %v2972 = vadd.f32 %v1939, %v2971
  %v2973 = vpop.f32.mrf.mxu0
  %v2974 = vadd.f32 %v1935, %v2973
  %v2975 = vpop.f32.mrf.mxu0
  %v2976 = vadd.f32 %v1939, %v2975
  %2977 = vdwg.mxu0
  %2978 = vmatprep.subr.bf16.mxu0 %v2603
  %2979 = vmatpush1.bf16.msra.mxu0 %v2602
  %2980 = vmatprep.subr.bf16.mxu0 %v2584
  %2981 = vmatpush1.bf16.msra.mxu0 %v2583
  %2982 = vmatprep.subr.bf16.mxu0 %v2565
  %2983 = vmatpush1.bf16.msra.mxu0 %v2564
  %2984 = vmatprep.subr.bf16.mxu0 %v2546
  %2985 = vmatpush1.bf16.msra.mxu0 %v2545
  %2986 = vmatprep.subr.bf16.mxu0 %v2527
  %2987 = vmatpush1.bf16.msra.mxu0 %v2526
  %2988 = vmatprep.subr.bf16.mxu0 %v2508
  %2989 = vmatpush1.bf16.msra.mxu0 %v2507
  %2990 = vmatprep.subr.bf16.mxu0 %v2489
  %2991 = vmatpush1.bf16.msra.mxu0 %v2488
  %2992 = vmatprep.subr.bf16.mxu0 %v2470
  %2993 = vmatpush1.bf16.msra.mxu0 %v2469
  %2994 = vmatprep.subr.bf16.mxu0 0
  %2995 = vmatpush2.bf16.msra.mxu0 0
  %2996 = vmatprep.subr.bf16.mxu0 0
  %2997 = vmatpush2.bf16.msra.mxu0 0
  %2998 = vmatprep.subr.bf16.mxu0 0
  %2999 = vmatpush2.bf16.msra.mxu0 0
  %3000 = vmatprep.subr.bf16.mxu0 0
  %3001 = vmatpush2.bf16.msra.mxu0 0
  %3002 = vmatprep.subr.bf16.mxu0 0
  %3003 = vmatpush2.bf16.msra.mxu0 0
  %3004 = vmatprep.subr.bf16.mxu0 0
  %3005 = vmatpush2.bf16.msra.mxu0 0
  %3006 = vmatprep.subr.bf16.mxu0 0
  %3007 = vmatpush2.bf16.msra.mxu0 0
  %3008 = vmatprep.subr.bf16.mxu0 0
  %3009 = vmatpush2.bf16.msra.mxu0 0
  %3010 = vmatprep.mubr.bf16.mxu0 0
  %3011 = vmatmul.mubr.bf16.gmra.mxu0 %v1733
  %v3012 = vpop.f32.mrf.mxu0
  %v3013 = vadd.f32 %v1943, %v3012
  %v3014 = vpop.f32.mrf.mxu0
  %v3015 = vadd.f32 %v1947, %v3014
  %v3016 = vpop.f32.mrf.mxu0
  %v3017 = vadd.f32 %v1943, %v3016
  %v3018 = vpop.f32.mrf.mxu0
  %v3019 = vadd.f32 %v1947, %v3018
  %3020 = vdwg.mxu0
  %3021 = vmatprep.subr.bf16.mxu0 %v2605
  %3022 = vmatpush1.bf16.msra.mxu0 %v2604
  %3023 = vmatprep.subr.bf16.mxu0 %v2586
  %3024 = vmatpush1.bf16.msra.mxu0 %v2585
  %3025 = vmatprep.subr.bf16.mxu0 %v2567
  %3026 = vmatpush1.bf16.msra.mxu0 %v2566
  %3027 = vmatprep.subr.bf16.mxu0 %v2548
  %3028 = vmatpush1.bf16.msra.mxu0 %v2547
  %3029 = vmatprep.subr.bf16.mxu0 %v2529
  %3030 = vmatpush1.bf16.msra.mxu0 %v2528
  %3031 = vmatprep.subr.bf16.mxu0 %v2510
  %3032 = vmatpush1.bf16.msra.mxu0 %v2509
  %3033 = vmatprep.subr.bf16.mxu0 %v2491
  %3034 = vmatpush1.bf16.msra.mxu0 %v2490
  %3035 = vmatprep.subr.bf16.mxu0 %v2472
  %3036 = vmatpush1.bf16.msra.mxu0 %v2471
  %3037 = vmatprep.subr.bf16.mxu0 0
  %3038 = vmatpush2.bf16.msra.mxu0 0
  %3039 = vmatprep.subr.bf16.mxu0 0
  %3040 = vmatpush2.bf16.msra.mxu0 0
  %3041 = vmatprep.subr.bf16.mxu0 0
  %3042 = vmatpush2.bf16.msra.mxu0 0
  %3043 = vmatprep.subr.bf16.mxu0 0
  %3044 = vmatpush2.bf16.msra.mxu0 0
  %3045 = vmatprep.subr.bf16.mxu0 0
  %3046 = vmatpush2.bf16.msra.mxu0 0
  %3047 = vmatprep.subr.bf16.mxu0 0
  %3048 = vmatpush2.bf16.msra.mxu0 0
  %3049 = vmatprep.subr.bf16.mxu0 0
  %3050 = vmatpush2.bf16.msra.mxu0 0
  %3051 = vmatprep.subr.bf16.mxu0 0
  %3052 = vmatpush2.bf16.msra.mxu0 0
  %3053 = vmatprep.mubr.bf16.mxu0 0
  %3054 = vmatmul.mubr.bf16.gmra.mxu0 %v1733
  %v3055 = vpop.f32.mrf.mxu0
  %v3056 = vadd.f32 %v1951, %v3055
  %v3057 = vpop.f32.mrf.mxu0
  %v3058 = vadd.f32 %v1955, %v3057
  %v3059 = vpop.f32.mrf.mxu0
  %v3060 = vadd.f32 %v1951, %v3059
  %v3061 = vpop.f32.mrf.mxu0
  %v3062 = vadd.f32 %v1955, %v3061
  %3063 = vdwg.mxu0
  %3064 = vmatprep.subr.bf16.mxu0 %v2607
  %3065 = vmatpush1.bf16.msra.mxu0 %v2606
  %3066 = vmatprep.subr.bf16.mxu0 %v2588
  %3067 = vmatpush1.bf16.msra.mxu0 %v2587
  %3068 = vmatprep.subr.bf16.mxu0 %v2569
  %3069 = vmatpush1.bf16.msra.mxu0 %v2568
  %3070 = vmatprep.subr.bf16.mxu0 %v2550
  %3071 = vmatpush1.bf16.msra.mxu0 %v2549
  %3072 = vmatprep.subr.bf16.mxu0 %v2531
  %3073 = vmatpush1.bf16.msra.mxu0 %v2530
  %3074 = vmatprep.subr.bf16.mxu0 %v2512
  %3075 = vmatpush1.bf16.msra.mxu0 %v2511
  %3076 = vmatprep.subr.bf16.mxu0 %v2493
  %3077 = vmatpush1.bf16.msra.mxu0 %v2492
  %3078 = vmatprep.subr.bf16.mxu0 %v2474
  %3079 = vmatpush1.bf16.msra.mxu0 %v2473
  %3080 = vmatprep.subr.bf16.mxu0 0
  %3081 = vmatpush2.bf16.msra.mxu0 0
  %3082 = vmatprep.subr.bf16.mxu0 0
  %3083 = vmatpush2.bf16.msra.mxu0 0
  %3084 = vmatprep.subr.bf16.mxu0 0
  %3085 = vmatpush2.bf16.msra.mxu0 0
  %3086 = vmatprep.subr.bf16.mxu0 0
  %3087 = vmatpush2.bf16.msra.mxu0 0
  %3088 = vmatprep.subr.bf16.mxu0 0
  %3089 = vmatpush2.bf16.msra.mxu0 0
  %3090 = vmatprep.subr.bf16.mxu0 0
  %3091 = vmatpush2.bf16.msra.mxu0 0
  %3092 = vmatprep.subr.bf16.mxu0 0
  %3093 = vmatpush2.bf16.msra.mxu0 0
  %3094 = vmatprep.subr.bf16.mxu0 0
  %3095 = vmatpush2.bf16.msra.mxu0 0
  %3096 = vmatprep.mubr.bf16.mxu0 0
  %3097 = vmatmul.mubr.bf16.gmra.mxu0 %v1733
  %v3098 = vpop.f32.mrf.mxu0
  %v3099 = vadd.f32 %v1959, %v3098
  %v3100 = vpop.f32.mrf.mxu0
  %v3101 = vadd.f32 %v1963, %v3100
  %v3102 = vpop.f32.mrf.mxu0
  %v3103 = vadd.f32 %v1959, %v3102
  %v3104 = vpop.f32.mrf.mxu0
  %v3105 = vadd.f32 %v1963, %v3104
  %3106 = vdwg.mxu0
  %3107 = vmatprep.subr.bf16.mxu0 %v2609
  %3108 = vmatpush1.bf16.msra.mxu0 %v2608
  %3109 = vmatprep.subr.bf16.mxu0 %v2590
  %3110 = vmatpush1.bf16.msra.mxu0 %v2589
  %3111 = vmatprep.subr.bf16.mxu0 %v2571
  %3112 = vmatpush1.bf16.msra.mxu0 %v2570
  %3113 = vmatprep.subr.bf16.mxu0 %v2552
  %3114 = vmatpush1.bf16.msra.mxu0 %v2551
  %3115 = vmatprep.subr.bf16.mxu0 %v2533
  %3116 = vmatpush1.bf16.msra.mxu0 %v2532
  %3117 = vmatprep.subr.bf16.mxu0 %v2514
  %3118 = vmatpush1.bf16.msra.mxu0 %v2513
  %3119 = vmatprep.subr.bf16.mxu0 %v2495
  %3120 = vmatpush1.bf16.msra.mxu0 %v2494
  %3121 = vmatprep.subr.bf16.mxu0 %v2476
  %3122 = vmatpush1.bf16.msra.mxu0 %v2475
  %3123 = vmatprep.subr.bf16.mxu0 0
  %3124 = vmatpush2.bf16.msra.mxu0 0
  %3125 = vmatprep.subr.bf16.mxu0 0
  %3126 = vmatpush2.bf16.msra.mxu0 0
  %3127 = vmatprep.subr.bf16.mxu0 0
  %3128 = vmatpush2.bf16.msra.mxu0 0
  %3129 = vmatprep.subr.bf16.mxu0 0
  %3130 = vmatpush2.bf16.msra.mxu0 0
  %3131 = vmatprep.subr.bf16.mxu0 0
  %3132 = vmatpush2.bf16.msra.mxu0 0
  %3133 = vmatprep.subr.bf16.mxu0 0
  %3134 = vmatpush2.bf16.msra.mxu0 0
  %3135 = vmatprep.subr.bf16.mxu0 0
  %3136 = vmatpush2.bf16.msra.mxu0 0
  %3137 = vmatprep.subr.bf16.mxu0 0
  %3138 = vmatpush2.bf16.msra.mxu0 0
  %3139 = vmatprep.mubr.bf16.mxu0 0
  %3140 = vmatmul.mubr.bf16.gmra.mxu0 %v1733
  %v3141 = vpop.f32.mrf.mxu0
  %v3142 = vadd.f32 %v1967, %v3141
  %v3143 = vpop.f32.mrf.mxu0
  %v3144 = vadd.f32 %v1971, %v3143
  %v3145 = vpop.f32.mrf.mxu0
  %v3146 = vadd.f32 %v1967, %v3145
  %v3147 = vpop.f32.mrf.mxu0
  %v3148 = vadd.f32 %v1971, %v3147
  %3149 = vdwg.mxu0
  %3150 = vmatprep.subr.bf16.mxu0 0
  %3151 = vmatpush1.bf16.msra.mxu0 %v2610
  %3152 = vmatprep.subr.bf16.mxu0 0
  %3153 = vmatpush1.bf16.msra.mxu0 %v2591
  %3154 = vmatprep.subr.bf16.mxu0 0
  %3155 = vmatpush1.bf16.msra.mxu0 %v2572
  %3156 = vmatprep.subr.bf16.mxu0 0
  %3157 = vmatpush1.bf16.msra.mxu0 %v2553
  %3158 = vmatprep.subr.bf16.mxu0 0
  %3159 = vmatpush1.bf16.msra.mxu0 %v2534
  %3160 = vmatprep.subr.bf16.mxu0 0
  %3161 = vmatpush1.bf16.msra.mxu0 %v2515
  %3162 = vmatprep.subr.bf16.mxu0 0
  %3163 = vmatpush1.bf16.msra.mxu0 %v2496
  %3164 = vmatprep.subr.bf16.mxu0 0
  %3165 = vmatpush1.bf16.msra.mxu0 %v2477
  %3166 = vmatprep.subr.bf16.mxu0 0
  %3167 = vmatpush2.bf16.msra.mxu0 0
  %3168 = vmatprep.subr.bf16.mxu0 0
  %3169 = vmatpush2.bf16.msra.mxu0 0
  %3170 = vmatprep.subr.bf16.mxu0 0
  %3171 = vmatpush2.bf16.msra.mxu0 0
  %3172 = vmatprep.subr.bf16.mxu0 0
  %3173 = vmatpush2.bf16.msra.mxu0 0
  %3174 = vmatprep.subr.bf16.mxu0 0
  %3175 = vmatpush2.bf16.msra.mxu0 0
  %3176 = vmatprep.subr.bf16.mxu0 0
  %3177 = vmatpush2.bf16.msra.mxu0 0
  %3178 = vmatprep.subr.bf16.mxu0 0
  %3179 = vmatpush2.bf16.msra.mxu0 0
  %3180 = vmatprep.subr.bf16.mxu0 0
  %3181 = vmatpush2.bf16.msra.mxu0 0
  %3182 = vmatprep.mubr.bf16.mxu0 0
  %3183 = vmatmul.mubr.bf16.gmra.mxu0 %v1733
  %v3184 = vpop.f32.mrf.mxu0
  %v3185 = vadd.f32 %v1975, %v3184
  %v3186 = vpop.f32.mrf.mxu0
  %v3187 = vpop.f32.mrf.mxu0
  %v3188 = vadd.f32 %v1975, %v3187
  %v3189 = vpop.f32.mrf.mxu0
  %3190 = vdwg.mxu0
  %3191 = vst [vmem:[%s7] sm:$0xff] %v2798
  %3192 = vst [vmem:[%s7 + $0x8] sm:$0xff] %v2800
  %3193 = vst [vmem:[%s7 + $0x10] sm:$0xff] %v2841
  %3194 = vst [vmem:[%s7 + $0x18] sm:$0xff] %v2843
  %3195 = vst [vmem:[%s7 + $0x20] sm:$0xff] %v2884
  %3196 = vst [vmem:[%s7 + $0x28] sm:$0xff] %v2886
  %3197 = vst [vmem:[%s7 + $0x30] sm:$0xff] %v2927
  %3198 = vst [vmem:[%s7 + $0x38] sm:$0xff] %v2929
  %3199 = vst [vmem:[%s7 + $0x40] sm:$0xff] %v2970
  %3200 = vst [vmem:[%s7 + $0x48] sm:$0xff] %v2972
  %3201 = vst [vmem:[%s7 + $0x50] sm:$0xff] %v3013
  %3202 = vst [vmem:[%s7 + $0x58] sm:$0xff] %v3015
  %3203 = vst [vmem:[%s7 + $0x60] sm:$0xff] %v3056
  %3204 = vst [vmem:[%s7 + $0x68] sm:$0xff] %v3058
  %3205 = vst [vmem:[%s7 + $0x70] sm:$0xff] %v3099
  %3206 = vst [vmem:[%s7 + $0x78] sm:$0xff] %v3101
  %3207 = vst [vmem:[%s7 + $0x80] sm:$0xff] %v3142
  %3208 = vst [vmem:[%s7 + $0x88] sm:$0xff] %v3144
  %vm3209 = vcmask 392192
  %3210 = vst.msk [vmem:[%s7 + $0x90] sm:$0xff] %vm3209, %v3185
  %3211 = vst [vmem:[%s7 + $0x98] sm:$0xff] %v2802
  %3212 = vst [vmem:[%s7 + $0xa0] sm:$0xff] %v2804
  %3213 = vst [vmem:[%s7 + $0xa8] sm:$0xff] %v2845
  %3214 = vst [vmem:[%s7 + $0xb0] sm:$0xff] %v2847
  %3215 = vst [vmem:[%s7 + $0xb8] sm:$0xff] %v2888
  %3216 = vst [vmem:[%s7 + $0xc0] sm:$0xff] %v2890
  %3217 = vst [vmem:[%s7 + $0xc8] sm:$0xff] %v2931
  %3218 = vst [vmem:[%s7 + $0xd0] sm:$0xff] %v2933
  %3219 = vst [vmem:[%s7 + $0xd8] sm:$0xff] %v2974
  %3220 = vst [vmem:[%s7 + $0xe0] sm:$0xff] %v2976
  %3221 = vst [vmem:[%s7 + $0xe8] sm:$0xff] %v3017
  %3222 = vst [vmem:[%s7 + $0xf0] sm:$0xff] %v3019
  %3223 = vst [vmem:[%s7 + $0xf8] sm:$0xff] %v3060
  %3224 = vst [vmem:[%s7 + $0x100] sm:$0xff] %v3062
  %3225 = vst [vmem:[%s7 + $0x108] sm:$0xff] %v3103
  %3226 = vst [vmem:[%s7 + $0x110] sm:$0xff] %v3105
  %3227 = vst [vmem:[%s7 + $0x118] sm:$0xff] %v3146
  %3228 = vst [vmem:[%s7 + $0x120] sm:$0xff] %v3148
  %3229 = vst.msk [vmem:[%s7 + $0x128] sm:$0xff] %vm3209, %v3188
  // Predicated region
  $region30: #{pixelrnn_forward.1} parent=0 // pred_check
    _
  $region31: #{pixelrnn_forward.1} parent=0 // pred_check_branch
    %3231 = sbr.rel (0) target = $region33
  $region32: #{pixelrnn_forward.1} parent=0 // pred_region
    _
  $region33: #{pixelrnn_forward.1} parent=0 // pred_fallthru
    _
  // Predicated region
  $region34: #{pixelrnn_forward.1} parent=0 // pred_check
    _
  $region35: #{pixelrnn_forward.1} parent=0 // pred_check_branch
    %3233 = sbr.rel (0) target = $region37
  $region36: #{pixelrnn_forward.1} parent=0 // pred_region
    _
  $region37: #{pixelrnn_forward.1} parent=0 // pred_fallthru
    _

</llo_original>
